<compile_context>
chip_gen: v5e
topology: v5e:2x2
jax: 0.10.0
libtpu: 0.0.40
codegen_flags: <defaults>
</compile_context>

<pallas_src>
import functools

import jax
import jax.numpy as jnp
import numpy as np
from jax.experimental import pallas as pl
from jax.experimental.pallas import tpu as pltpu

NH = 8           # kernels per relation group (self.nh)
K = 4            # spatial kernel size (self.k)
HID = 32         # hidden width of relation_layer
EPS = 1e-12      # F.normalize eps
GB_MAX = 1024    # max relation groups (lanes) per grid step; multiple of 128


def create_gaussian_w_np(k):
    d = (np.arange(k, dtype=np.float32) - k / 2.0) ** 2
    std_x, std_y = k / 2.0, float(k)
    x = np.exp(-d / std_x)
    y = np.exp(-d / std_y)
    return (y[:, None] * x[None]).astype(np.float32)          # (k, k)


def _round_up(a, m):
    return (a + m - 1) // m * m


def _cdiv(a, b):
    return (a + b - 1) // b


def _choose_tiling(s, gb_max):
    """Groups per step (lane width): multiple of 128, aim for ~4 (even) steps."""
    gb_max = max(128, (gb_max // 128) * 128)
    gb = min(gb_max, max(128, _round_up(_cdiv(s, 4), 128)))
    steps = _cdiv(s, gb)
    # prefer an even number of steps (v7x: 2 TensorCores share the parallel axis)
    if steps > 1 and steps % 2 == 1:
        gb_alt = max(128, _round_up(_cdiv(s, steps + 1), 128))
        if gb_alt <= gb_max and _cdiv(s, gb_alt) % 2 == 0:
            gb = gb_alt
            steps = _cdiv(s, gb)
    return gb, steps


def ram_kernel(x_ref, p_ref, w1_ref, b1_ref, w2_ref, b2_ref, w3_ref, b3_ref,
               o_ref, xt_ref, *, gb, nh, c, kk, gauss):
    """One grid step = `gb` relation groups; group index sits in the lane axis.

    x_ref : (gb, nh*c*kk)  original kernels (one group per sublane row)
    p_ref : (nh*c, nh*c)   head-major -> channel-major row permutation
    w*_ref: relation-layer weights transposed to (out, in); b*_ref: (out, 1)
    o_ref : (c*kk, gb)     updated kernel, lane-dense
    xt_ref: (nh*c*kk, gb)  VMEM scratch holding the transposed tile
    """
    ckk = c * kk
    nl = nh * ckk

    # ---- 1) transpose the tile into VMEM scratch: (gb, nl) -> (nl, gb) ------
    # 128x128 chunks keep each transpose well inside the vreg file.
    for m in range(nl // 128):
        for j in range(gb // 128):
            blk = x_ref[pl.ds(j * 128, 128), pl.ds(m * 128, 128)]   # (128, 128)
            xt_ref[pl.ds(m * 128, 128), pl.ds(j * 128, 128)] = blk.T

    # ---- 2) gaussian-weighted max-pool over the full (k, k) window ----------
    # strided slab p = rows {r*kk + p} -> (nh*c, gb), head-major rows (i*c+ch);
    # each slab shares a single scalar gaussian weight.
    pooled = xt_ref[pl.ds(0, nh * c, stride=kk), :] * gauss[0]
    for p in range(1, kk):
        pooled = jnp.maximum(
            pooled, xt_ref[pl.ds(p, nh * c, stride=kk), :] * gauss[p])

    # permute rows to channel-major (ch*nh + i) so channels are a leading axis
    pooled = jnp.dot(p_ref[...], pooled, preferred_element_type=jnp.float32)
    p3 = pooled.reshape(c, nh, gb)                                   # (c, nh, gb)

    # ---- 3) F.normalize over channels (per group, per head) ----------------
    ss = jnp.sum(p3 * p3, axis=0)                                    # (nh, gb)
    ks3 = p3 * jax.lax.rsqrt(jnp.maximum(ss, EPS * EPS))[None, :, :]

    # ---- 4) correlation matrix, flattened row-major over (i, j) -------------
    cor = ks3[0][:, None, :] * ks3[0][None, :, :]                    # (nh, nh, gb)
    for ch in range(1, c):
        cor = cor + ks3[ch][:, None, :] * ks3[ch][None, :, :]
    cor = cor.reshape(nh * nh, gb)                                   # (nh*nh, gb)

    # ---- 5) relation MLP: batch (= groups) in the lane axis (MXU, N = gb) ---
    h1 = jnp.maximum(
        jnp.dot(w1_ref[...], cor, preferred_element_type=jnp.float32)
        + b1_ref[...], 0.0)                                          # (hid, gb)
    h2 = jnp.maximum(
        jnp.dot(w2_ref[...], h1, preferred_element_type=jnp.float32)
        + b2_ref[...], 0.0)                                          # (hid, gb)
    kwu = (jnp.dot(w3_ref[...], h2, preferred_element_type=jnp.float32)
           + b3_ref[...])                                            # (nh, gb)

    # ---- 6) F.normalize over heads ------------------------------------------
    kss = jnp.sum(kwu * kwu, axis=0, keepdims=True)                  # (1, gb)
    kw = kwu * jax.lax.rsqrt(jnp.maximum(kss, EPS * EPS))            # (nh, gb)

    # ---- 7) update_kernel = sum_i kw[i] * okernels[i] (lane-dense store) ----
    upd = kw[0:1, :] * xt_ref[pl.ds(0, ckk), :]                      # (ckk, gb)
    for i in range(1, nh):
        upd = upd + kw[i:i + 1, :] * xt_ref[pl.ds(i * ckk, ckk), :]
    o_ref[...] = upd


def ram_forward_pallas(x, params, nh=NH, k=K, gb_max=GB_MAX):
    """x: (n, c, k, k) float32 with n % nh == 0. Returns (n//nh, 1, c, k, k)."""
    n, c, h, w = x.shape
    assert h == k and w == k and n % nh == 0
    s = n // nh
    kk = k * k
    ckk = c * kk
    nl = nh * ckk
    assert nl % 128 == 0 and 128 % kk == 0, "tiling assumes nh*c*k*k % 128 == 0"

    gb, num_steps = _choose_tiling(s, gb_max)
    s_pad = num_steps * gb

    x_flat = x.astype(jnp.float32).reshape(s, nl)        # lane-dense 512-wide rows
    if s_pad != s:
        x_flat = jnp.pad(x_flat, ((0, s_pad - s), (0, 0)))

    gauss = tuple(float(v) for v in create_gaussian_w_np(k).reshape(-1))

    # permutation: head-major row (i*c + ch) -> channel-major row (ch*nh + i)
    perm_np = np.zeros((nh * c, nh * c), np.float32)
    for i in range(nh):
        for ch in range(c):
            perm_np[ch * nh + i, i * c + ch] = 1.0
    perm = jnp.asarray(perm_np)

    w1, b1, w2, b2, w3, b3 = params          # weights stored (in, out); biases (1, out)
    hid = w1.shape[1]
    w1t, w2t, w3t = w1.T, w2.T, w3.T
    b1t, b2t, b3t = b1.reshape(hid, 1), b2.reshape(hid, 1), b3.reshape(nh, 1)

    out = pl.pallas_call(
        functools.partial(ram_kernel, gb=gb, nh=nh, c=c, kk=kk, gauss=gauss),
        out_shape=jax.ShapeDtypeStruct((ckk, s_pad), jnp.float32),
        grid_spec=pltpu.PrefetchScalarGridSpec(
            num_scalar_prefetch=0,
            grid=(num_steps,),
            in_specs=[
                pl.BlockSpec((gb, nl), lambda i: (i, 0)),           # okernels tile
                pl.BlockSpec((nh * c, nh * c), lambda i: (0, 0)),   # permutation
                pl.BlockSpec((hid, nh * nh), lambda i: (0, 0)),     # W1^T
                pl.BlockSpec((hid, 1), lambda i: (0, 0)),           # b1
                pl.BlockSpec((hid, hid), lambda i: (0, 0)),         # W2^T
                pl.BlockSpec((hid, 1), lambda i: (0, 0)),           # b2
                pl.BlockSpec((nh, hid), lambda i: (0, 0)),          # W3^T
                pl.BlockSpec((nh, 1), lambda i: (0, 0)),            # b3
            ],
            out_specs=pl.BlockSpec((ckk, gb), lambda i: (0, i)),
            scratch_shapes=[pltpu.VMEM((nl, gb), jnp.float32)],
        ),
        compiler_params=pltpu.CompilerParams(
            dimension_semantics=("parallel",)),   # independent groups -> both TCs
    )(x_flat, perm, w1t, b1t, w2t, b2t, w3t, b3t)

    # (ckk, s_pad) -> (s, 1, c, k, k); only the small output is transposed here.
    return out[:, :s].T.reshape(s, 1, c, k, k)


def ram_forward_ref(x, params, nh=NH, k=K):
    """Pure-JAX reference mirroring the PyTorch forward (batched over groups)."""
    n, c, h, w = x.shape
    s = n // nh
    gw = jnp.asarray(create_gaussian_w_np(k))
    w1, b1, w2, b2, w3, b3 = params
    ok = x.astype(jnp.float32).reshape(s, nh, c, h, w)
    kern = ok * gw[None, None, None]
    pooled = jnp.max(kern.reshape(s, nh, c, h * w), axis=-1)            # (s, nh, c)
    ks = pooled / jnp.maximum(
        jnp.linalg.norm(pooled, axis=-1, keepdims=True), EPS)           # over channels
    cor = jnp.einsum('sic,sjc->sij', ks, ks).reshape(s, nh * nh)
    h1 = jax.nn.relu(cor @ w1 + b1)
    h2 = jax.nn.relu(h1 @ w2 + b2)
    o = h2 @ w3 + b3                                                    # (s, nh)
    kw = o / jnp.maximum(jnp.linalg.norm(o, axis=-1, keepdims=True), EPS)
    upd = jnp.einsum('si,sichw->schw', kw, ok)
    return upd[:, None]


def init_params(key, nh=NH, hid=HID):
    """Deterministic init: Linear weights stored transposed (in_dim, out_dim)."""
    ks = jax.random.split(key, 6)

    def lin(kw_, kb_, fan_in, fan_out):
        bound = 1.0 / np.sqrt(fan_in)
        wgt = jax.random.uniform(kw_, (fan_in, fan_out), jnp.float32, -bound, bound)
        b = jax.random.uniform(kb_, (1, fan_out), jnp.float32, -bound, bound)
        return wgt, b

    w1, b1 = lin(ks[0], ks[1], nh * nh, hid)
    w2, b2 = lin(ks[2], ks[3], hid, hid)
    w3, b3 = lin(ks[4], ks[5], hid, nh)
    return (w1, b1, w2, b2, w3, b3)


if __name__ == "__main__":
    key = jax.random.PRNGKey(0)
    k_x, k_x2, k_p = jax.random.split(key, 3)
    params = init_params(k_p)

    # small example consistent with the module: 2 relation groups, c=4, 4x4 kernels
    n, c = NH * 2, 4
    x = jax.random.normal(k_x, (n, c, K, K), dtype=jnp.float32)
    out = jax.block_until_ready(ram_forward_pallas(x, params))
    ref = ram_forward_ref(x, params)
    np.testing.assert_allclose(np.asarray(out), np.asarray(ref),
                               rtol=2e-2, atol=2e-2)
    assert out.shape == (n // NH, 1, c, K, K)

    # exercise the multi-step grid + group-padding path (gb=128 -> grid=(3,), s_pad=384)
    n2 = NH * 300
    x2 = jax.random.normal(k_x2, (n2, c, K, K), dtype=jnp.float32)
    out2 = jax.block_until_ready(ram_forward_pallas(x2, params, gb_max=128))
    ref2 = ram_forward_ref(x2, params)
    np.testing.assert_allclose(np.asarray(out2), np.asarray(ref2),
                               rtol=2e-2, atol=2e-2)
    assert out2.shape == (n2 // NH, 1, c, K, K)

    print("KERNEL_OK")
</pallas_src>

<mosaic_0001>
module attributes {stable_mosaic.version = 11 : i64} {
  func.func @ram_kernel(%arg0: i32, %arg1: memref<128x512xf32, #tpu.memory_space<vmem>>, %arg2: memref<32x32xf32, #tpu.memory_space<vmem>>, %arg3: memref<32x64xf32, #tpu.memory_space<vmem>>, %arg4: memref<32x1xf32, #tpu.memory_space<vmem>>, %arg5: memref<32x32xf32, #tpu.memory_space<vmem>>, %arg6: memref<32x1xf32, #tpu.memory_space<vmem>>, %arg7: memref<8x32xf32, #tpu.memory_space<vmem>>, %arg8: memref<8x1xf32, #tpu.memory_space<vmem>>, %arg9: memref<64x128xf32, #tpu.memory_space<vmem>>, %arg10: memref<512x128xf32, #tpu.memory_space<vmem>>) attributes {dimension_semantics = [#tpu.dimension_semantics<parallel>], iteration_bounds = array<i64: 1>, scalar_prefetch = 0 : i64, scratch_operands = 1 : i64, tpu.core_type = #tpu.core_type<tc>, window_params = [{transform_indices = @transform_0, window_bounds = array<i64: 128, 512>}, {pipeline_mode = #tpu.pipeline_mode<synchronous>, transform_indices = @transform_1, window_bounds = array<i64: 32, 32>}, {pipeline_mode = #tpu.pipeline_mode<synchronous>, transform_indices = @transform_2, window_bounds = array<i64: 32, 64>}, {pipeline_mode = #tpu.pipeline_mode<synchronous>, transform_indices = @transform_3, window_bounds = array<i64: 32, 1>}, {pipeline_mode = #tpu.pipeline_mode<synchronous>, transform_indices = @transform_4, window_bounds = array<i64: 32, 32>}, {pipeline_mode = #tpu.pipeline_mode<synchronous>, transform_indices = @transform_5, window_bounds = array<i64: 32, 1>}, {pipeline_mode = #tpu.pipeline_mode<synchronous>, transform_indices = @transform_6, window_bounds = array<i64: 8, 32>}, {pipeline_mode = #tpu.pipeline_mode<synchronous>, transform_indices = @transform_7, window_bounds = array<i64: 8, 1>}, {transform_indices = @transform_8, window_bounds = array<i64: 64, 128>}]} {
    %c0 = arith.constant 0 : index
    %c0_0 = arith.constant 0 : index
    %0 = vector.load %arg1[%c0, %c0_0] : memref<128x512xf32, #tpu.memory_space<vmem>>, vector<128x128xf32>
    %1 = tpu.transpose %0, [1, 0] : vector<128x128xf32> -> vector<128x128xf32>
    %c0_1 = arith.constant 0 : index
    %c0_2 = arith.constant 0 : index
    %2 = vector.load %arg10[%c0_1, %c0_2] : memref<512x128xf32, #tpu.memory_space<vmem>>, vector<128x128xf32>
    tpu.vector_store %arg10[%c0_1, %c0_2], %1 {strides = array<i32>} : memref<512x128xf32, #tpu.memory_space<vmem>>, vector<128x128xf32>,
    %c0_3 = arith.constant 0 : index
    %c128 = arith.constant 128 : index
    %3 = vector.load %arg1[%c0_3, %c128] : memref<128x512xf32, #tpu.memory_space<vmem>>, vector<128x128xf32>
    %4 = tpu.transpose %3, [1, 0] : vector<128x128xf32> -> vector<128x128xf32>
    %c128_4 = arith.constant 128 : index
    %c0_5 = arith.constant 0 : index
    %5 = vector.load %arg10[%c128_4, %c0_5] : memref<512x128xf32, #tpu.memory_space<vmem>>, vector<128x128xf32>
    tpu.vector_store %arg10[%c128_4, %c0_5], %4 {strides = array<i32>} : memref<512x128xf32, #tpu.memory_space<vmem>>, vector<128x128xf32>,
    %c0_6 = arith.constant 0 : index
    %c256 = arith.constant 256 : index
    %6 = vector.load %arg1[%c0_6, %c256] : memref<128x512xf32, #tpu.memory_space<vmem>>, vector<128x128xf32>
    %7 = tpu.transpose %6, [1, 0] : vector<128x128xf32> -> vector<128x128xf32>
    %c256_7 = arith.constant 256 : index
    %c0_8 = arith.constant 0 : index
    %8 = vector.load %arg10[%c256_7, %c0_8] : memref<512x128xf32, #tpu.memory_space<vmem>>, vector<128x128xf32>
    tpu.vector_store %arg10[%c256_7, %c0_8], %7 {strides = array<i32>} : memref<512x128xf32, #tpu.memory_space<vmem>>, vector<128x128xf32>,
    %c0_9 = arith.constant 0 : index
    %c384 = arith.constant 384 : index
    %9 = vector.load %arg1[%c0_9, %c384] : memref<128x512xf32, #tpu.memory_space<vmem>>, vector<128x128xf32>
    %10 = tpu.transpose %9, [1, 0] : vector<128x128xf32> -> vector<128x128xf32>
    %c384_10 = arith.constant 384 : index
    %c0_11 = arith.constant 0 : index
    %11 = vector.load %arg10[%c384_10, %c0_11] : memref<512x128xf32, #tpu.memory_space<vmem>>, vector<128x128xf32>
    tpu.vector_store %arg10[%c384_10, %c0_11], %10 {strides = array<i32>} : memref<512x128xf32, #tpu.memory_space<vmem>>, vector<128x128xf32>,
    %c0_12 = arith.constant 0 : index
    %c0_13 = arith.constant 0 : index
    %12 = tpu.strided_load %arg10[%c0_12, %c0_13] {strides = array<i32: 16, 1>} : memref<512x128xf32, #tpu.memory_space<vmem>>, vector<32x128xf32>
    %cst = arith.constant 0.0497870632 : f32
    %13 = vector.broadcast %cst : f32 to vector<32x128xf32>
    %14 = arith.mulf %12, %13 : vector<32x128xf32>
    %c1 = arith.constant 1 : index
    %c0_14 = arith.constant 0 : index
    %15 = tpu.strided_load %arg10[%c1, %c0_14] {strides = array<i32: 16, 1>} : memref<512x128xf32, #tpu.memory_space<vmem>>, vector<32x128xf32>
    %cst_15 = arith.constant 0.223130152 : f32
    %16 = vector.broadcast %cst_15 : f32 to vector<32x128xf32>
    %17 = arith.mulf %15, %16 : vector<32x128xf32>
    %18 = arith.maximumf %14, %17 : vector<32x128xf32>
    %c2 = arith.constant 2 : index
    %c0_16 = arith.constant 0 : index
    %19 = tpu.strided_load %arg10[%c2, %c0_16] {strides = array<i32: 16, 1>} : memref<512x128xf32, #tpu.memory_space<vmem>>, vector<32x128xf32>
    %cst_17 = arith.constant 0.367879421 : f32
    %20 = vector.broadcast %cst_17 : f32 to vector<32x128xf32>
    %21 = arith.mulf %19, %20 : vector<32x128xf32>
    %22 = arith.maximumf %18, %21 : vector<32x128xf32>
    %c3 = arith.constant 3 : index
    %c0_18 = arith.constant 0 : index
    %23 = tpu.strided_load %arg10[%c3, %c0_18] {strides = array<i32: 16, 1>} : memref<512x128xf32, #tpu.memory_space<vmem>>, vector<32x128xf32>
    %cst_19 = arith.constant 0.223130152 : f32
    %24 = vector.broadcast %cst_19 : f32 to vector<32x128xf32>
    %25 = arith.mulf %23, %24 : vector<32x128xf32>
    %26 = arith.maximumf %22, %25 : vector<32x128xf32>
    %c4 = arith.constant 4 : index
    %c0_20 = arith.constant 0 : index
    %27 = tpu.strided_load %arg10[%c4, %c0_20] {strides = array<i32: 16, 1>} : memref<512x128xf32, #tpu.memory_space<vmem>>, vector<32x128xf32>
    %cst_21 = arith.constant 0.105399214 : f32
    %28 = vector.broadcast %cst_21 : f32 to vector<32x128xf32>
    %29 = arith.mulf %27, %28 : vector<32x128xf32>
    %30 = arith.maximumf %26, %29 : vector<32x128xf32>
    %c5 = arith.constant 5 : index
    %c0_22 = arith.constant 0 : index
    %31 = tpu.strided_load %arg10[%c5, %c0_22] {strides = array<i32: 16, 1>} : memref<512x128xf32, #tpu.memory_space<vmem>>, vector<32x128xf32>
    %cst_23 = arith.constant 0.472366512 : f32
    %32 = vector.broadcast %cst_23 : f32 to vector<32x128xf32>
    %33 = arith.mulf %31, %32 : vector<32x128xf32>
    %34 = arith.maximumf %30, %33 : vector<32x128xf32>
    %c6 = arith.constant 6 : index
    %c0_24 = arith.constant 0 : index
    %35 = tpu.strided_load %arg10[%c6, %c0_24] {strides = array<i32: 16, 1>} : memref<512x128xf32, #tpu.memory_space<vmem>>, vector<32x128xf32>
    %cst_25 = arith.constant 0.778800726 : f32
    %36 = vector.broadcast %cst_25 : f32 to vector<32x128xf32>
    %37 = arith.mulf %35, %36 : vector<32x128xf32>
    %38 = arith.maximumf %34, %37 : vector<32x128xf32>
    %c7 = arith.constant 7 : index
    %c0_26 = arith.constant 0 : index
    %39 = tpu.strided_load %arg10[%c7, %c0_26] {strides = array<i32: 16, 1>} : memref<512x128xf32, #tpu.memory_space<vmem>>, vector<32x128xf32>
    %cst_27 = arith.constant 0.472366512 : f32
    %40 = vector.broadcast %cst_27 : f32 to vector<32x128xf32>
    %41 = arith.mulf %39, %40 : vector<32x128xf32>
    %42 = arith.maximumf %38, %41 : vector<32x128xf32>
    %c8 = arith.constant 8 : index
    %c0_28 = arith.constant 0 : index
    %43 = tpu.strided_load %arg10[%c8, %c0_28] {strides = array<i32: 16, 1>} : memref<512x128xf32, #tpu.memory_space<vmem>>, vector<32x128xf32>
    %cst_29 = arith.constant 0.135335281 : f32
    %44 = vector.broadcast %cst_29 : f32 to vector<32x128xf32>
    %45 = arith.mulf %43, %44 : vector<32x128xf32>
    %46 = arith.maximumf %42, %45 : vector<32x128xf32>
    %c9 = arith.constant 9 : index
    %c0_30 = arith.constant 0 : index
    %47 = tpu.strided_load %arg10[%c9, %c0_30] {strides = array<i32: 16, 1>} : memref<512x128xf32, #tpu.memory_space<vmem>>, vector<32x128xf32>
    %cst_31 = arith.constant 0.606530666 : f32
    %48 = vector.broadcast %cst_31 : f32 to vector<32x128xf32>
    %49 = arith.mulf %47, %48 : vector<32x128xf32>
    %50 = arith.maximumf %46, %49 : vector<32x128xf32>
    %c10 = arith.constant 10 : index
    %c0_32 = arith.constant 0 : index
    %51 = tpu.strided_load %arg10[%c10, %c0_32] {strides = array<i32: 16, 1>} : memref<512x128xf32, #tpu.memory_space<vmem>>, vector<32x128xf32>
    %cst_33 = arith.constant 1.000000e+00 : f32
    %52 = vector.broadcast %cst_33 : f32 to vector<32x128xf32>
    %53 = arith.mulf %51, %52 : vector<32x128xf32>
    %54 = arith.maximumf %50, %53 : vector<32x128xf32>
    %c11 = arith.constant 11 : index
    %c0_34 = arith.constant 0 : index
    %55 = tpu.strided_load %arg10[%c11, %c0_34] {strides = array<i32: 16, 1>} : memref<512x128xf32, #tpu.memory_space<vmem>>, vector<32x128xf32>
    %cst_35 = arith.constant 0.606530666 : f32
    %56 = vector.broadcast %cst_35 : f32 to vector<32x128xf32>
    %57 = arith.mulf %55, %56 : vector<32x128xf32>
    %58 = arith.maximumf %54, %57 : vector<32x128xf32>
    %c12 = arith.constant 12 : index
    %c0_36 = arith.constant 0 : index
    %59 = tpu.strided_load %arg10[%c12, %c0_36] {strides = array<i32: 16, 1>} : memref<512x128xf32, #tpu.memory_space<vmem>>, vector<32x128xf32>
    %cst_37 = arith.constant 0.105399214 : f32
    %60 = vector.broadcast %cst_37 : f32 to vector<32x128xf32>
    %61 = arith.mulf %59, %60 : vector<32x128xf32>
    %62 = arith.maximumf %58, %61 : vector<32x128xf32>
    %c13 = arith.constant 13 : index
    %c0_38 = arith.constant 0 : index
    %63 = tpu.strided_load %arg10[%c13, %c0_38] {strides = array<i32: 16, 1>} : memref<512x128xf32, #tpu.memory_space<vmem>>, vector<32x128xf32>
    %cst_39 = arith.constant 0.472366512 : f32
    %64 = vector.broadcast %cst_39 : f32 to vector<32x128xf32>
    %65 = arith.mulf %63, %64 : vector<32x128xf32>
    %66 = arith.maximumf %62, %65 : vector<32x128xf32>
    %c14 = arith.constant 14 : index
    %c0_40 = arith.constant 0 : index
    %67 = tpu.strided_load %arg10[%c14, %c0_40] {strides = array<i32: 16, 1>} : memref<512x128xf32, #tpu.memory_space<vmem>>, vector<32x128xf32>
    %cst_41 = arith.constant 0.778800726 : f32
    %68 = vector.broadcast %cst_41 : f32 to vector<32x128xf32>
    %69 = arith.mulf %67, %68 : vector<32x128xf32>
    %70 = arith.maximumf %66, %69 : vector<32x128xf32>
    %c15 = arith.constant 15 : index
    %c0_42 = arith.constant 0 : index
    %71 = tpu.strided_load %arg10[%c15, %c0_42] {strides = array<i32: 16, 1>} : memref<512x128xf32, #tpu.memory_space<vmem>>, vector<32x128xf32>
    %cst_43 = arith.constant 0.472366512 : f32
    %72 = vector.broadcast %cst_43 : f32 to vector<32x128xf32>
    %73 = arith.mulf %71, %72 : vector<32x128xf32>
    %74 = arith.maximumf %70, %73 : vector<32x128xf32>
    %c0_44 = arith.constant 0 : index
    %c0_45 = arith.constant 0 : index
    %75 = vector.load %arg2[%c0_44, %c0_45] : memref<32x32xf32, #tpu.memory_space<vmem>>, vector<32x32xf32>
    %cst_46 = arith.constant dense<0.000000e+00> : vector<32x128xf32>
    %76 = tpu.matmul %75, %74, %cst_46 {dimension_numbers = #tpu.dot_dimension_numbers<[1], [0], [0], [1], [0, 0, 1, 1], [], []>} : vector<32x32xf32>, vector<32x128xf32>, vector<32x128xf32> -> vector<32x128xf32>
    %77 = vector.shape_cast %76 : vector<32x128xf32> to vector<4x8x128xf32>
    %78 = arith.mulf %77, %77 : vector<4x8x128xf32>
    %cst_47 = arith.constant dense<0.000000e+00> : vector<8x128xf32>
    %79 = vector.multi_reduction <add>, %78, %cst_47 [0] : vector<4x8x128xf32> to vector<8x128xf32>
    %cst_48 = arith.constant 1.000000e-24 : f32
    %80 = vector.broadcast %cst_48 : f32 to vector<8x128xf32>
    %81 = arith.maximumf %79, %80 : vector<8x128xf32>
    %82 = math.rsqrt %81 : vector<8x128xf32>
    %83 = vector.shape_cast %82 : vector<8x128xf32> to vector<1x8x128xf32>
    %84 = vector.broadcast %83 : vector<1x8x128xf32> to vector<4x8x128xf32>
    %85 = arith.mulf %77, %84 : vector<4x8x128xf32>
    %86 = vector.extract_strided_slice %85 {offsets = [0, 0, 0], sizes = [1, 8, 128], strides = [1, 1, 1]} : vector<4x8x128xf32> to vector<1x8x128xf32>
    %87 = vector.shape_cast %86 : vector<1x8x128xf32> to vector<8x128xf32>
    %88 = vector.shape_cast %87 : vector<8x128xf32> to vector<8x1x128xf32>
    %89 = vector.extract_strided_slice %85 {offsets = [0, 0, 0], sizes = [1, 8, 128], strides = [1, 1, 1]} : vector<4x8x128xf32> to vector<1x8x128xf32>
    %90 = vector.shape_cast %89 : vector<1x8x128xf32> to vector<8x128xf32>
    %91 = vector.shape_cast %90 : vector<8x128xf32> to vector<1x8x128xf32>
    %92 = vector.broadcast %88 : vector<8x1x128xf32> to vector<8x8x128xf32>
    %93 = vector.broadcast %91 : vector<1x8x128xf32> to vector<8x8x128xf32>
    %94 = arith.mulf %92, %93 : vector<8x8x128xf32>
    %95 = vector.extract_strided_slice %85 {offsets = [1, 0, 0], sizes = [1, 8, 128], strides = [1, 1, 1]} : vector<4x8x128xf32> to vector<1x8x128xf32>
    %96 = vector.shape_cast %95 : vector<1x8x128xf32> to vector<8x128xf32>
    %97 = vector.shape_cast %96 : vector<8x128xf32> to vector<8x1x128xf32>
    %98 = vector.extract_strided_slice %85 {offsets = [1, 0, 0], sizes = [1, 8, 128], strides = [1, 1, 1]} : vector<4x8x128xf32> to vector<1x8x128xf32>
    %99 = vector.shape_cast %98 : vector<1x8x128xf32> to vector<8x128xf32>
    %100 = vector.shape_cast %99 : vector<8x128xf32> to vector<1x8x128xf32>
    %101 = vector.broadcast %97 : vector<8x1x128xf32> to vector<8x8x128xf32>
    %102 = vector.broadcast %100 : vector<1x8x128xf32> to vector<8x8x128xf32>
    %103 = arith.mulf %101, %102 : vector<8x8x128xf32>
    %104 = arith.addf %94, %103 : vector<8x8x128xf32>
    %105 = vector.extract_strided_slice %85 {offsets = [2, 0, 0], sizes = [1, 8, 128], strides = [1, 1, 1]} : vector<4x8x128xf32> to vector<1x8x128xf32>
    %106 = vector.shape_cast %105 : vector<1x8x128xf32> to vector<8x128xf32>
    %107 = vector.shape_cast %106 : vector<8x128xf32> to vector<8x1x128xf32>
    %108 = vector.extract_strided_slice %85 {offsets = [2, 0, 0], sizes = [1, 8, 128], strides = [1, 1, 1]} : vector<4x8x128xf32> to vector<1x8x128xf32>
    %109 = vector.shape_cast %108 : vector<1x8x128xf32> to vector<8x128xf32>
    %110 = vector.shape_cast %109 : vector<8x128xf32> to vector<1x8x128xf32>
    %111 = vector.broadcast %107 : vector<8x1x128xf32> to vector<8x8x128xf32>
    %112 = vector.broadcast %110 : vector<1x8x128xf32> to vector<8x8x128xf32>
    %113 = arith.mulf %111, %112 : vector<8x8x128xf32>
    %114 = arith.addf %104, %113 : vector<8x8x128xf32>
    %115 = vector.extract_strided_slice %85 {offsets = [3, 0, 0], sizes = [1, 8, 128], strides = [1, 1, 1]} : vector<4x8x128xf32> to vector<1x8x128xf32>
    %116 = vector.shape_cast %115 : vector<1x8x128xf32> to vector<8x128xf32>
    %117 = vector.shape_cast %116 : vector<8x128xf32> to vector<8x1x128xf32>
    %118 = vector.extract_strided_slice %85 {offsets = [3, 0, 0], sizes = [1, 8, 128], strides = [1, 1, 1]} : vector<4x8x128xf32> to vector<1x8x128xf32>
    %119 = vector.shape_cast %118 : vector<1x8x128xf32> to vector<8x128xf32>
    %120 = vector.shape_cast %119 : vector<8x128xf32> to vector<1x8x128xf32>
    %121 = vector.broadcast %117 : vector<8x1x128xf32> to vector<8x8x128xf32>
    %122 = vector.broadcast %120 : vector<1x8x128xf32> to vector<8x8x128xf32>
    %123 = arith.mulf %121, %122 : vector<8x8x128xf32>
    %124 = arith.addf %114, %123 : vector<8x8x128xf32>
    %125 = vector.shape_cast %124 : vector<8x8x128xf32> to vector<64x128xf32>
    %c0_49 = arith.constant 0 : index
    %c0_50 = arith.constant 0 : index
    %126 = vector.load %arg3[%c0_49, %c0_50] : memref<32x64xf32, #tpu.memory_space<vmem>>, vector<32x64xf32>
    %cst_51 = arith.constant dense<0.000000e+00> : vector<32x128xf32>
    %127 = tpu.matmul %126, %125, %cst_51 {dimension_numbers = #tpu.dot_dimension_numbers<[1], [0], [0], [1], [0, 0, 1, 1], [], []>} : vector<32x64xf32>, vector<64x128xf32>, vector<32x128xf32> -> vector<32x128xf32>
    %c0_52 = arith.constant 0 : index
    %c0_53 = arith.constant 0 : index
    %128 = vector.load %arg4[%c0_52, %c0_53] : memref<32x1xf32, #tpu.memory_space<vmem>>, vector<32x1xf32>
    %129 = vector.broadcast %128 : vector<32x1xf32> to vector<32x128xf32>
    %130 = arith.addf %127, %129 : vector<32x128xf32>
    %cst_54 = arith.constant 0.000000e+00 : f32
    %131 = vector.broadcast %cst_54 : f32 to vector<32x128xf32>
    %132 = arith.maximumf %130, %131 : vector<32x128xf32>
    %c0_55 = arith.constant 0 : index
    %c0_56 = arith.constant 0 : index
    %133 = vector.load %arg5[%c0_55, %c0_56] : memref<32x32xf32, #tpu.memory_space<vmem>>, vector<32x32xf32>
    %cst_57 = arith.constant dense<0.000000e+00> : vector<32x128xf32>
    %134 = tpu.matmul %133, %132, %cst_57 {dimension_numbers = #tpu.dot_dimension_numbers<[1], [0], [0], [1], [0, 0, 1, 1], [], []>} : vector<32x32xf32>, vector<32x128xf32>, vector<32x128xf32> -> vector<32x128xf32>
    %c0_58 = arith.constant 0 : index
    %c0_59 = arith.constant 0 : index
    %135 = vector.load %arg6[%c0_58, %c0_59] : memref<32x1xf32, #tpu.memory_space<vmem>>, vector<32x1xf32>
    %136 = vector.broadcast %135 : vector<32x1xf32> to vector<32x128xf32>
    %137 = arith.addf %134, %136 : vector<32x128xf32>
    %cst_60 = arith.constant 0.000000e+00 : f32
    %138 = vector.broadcast %cst_60 : f32 to vector<32x128xf32>
    %139 = arith.maximumf %137, %138 : vector<32x128xf32>
    %c0_61 = arith.constant 0 : index
    %c0_62 = arith.constant 0 : index
    %140 = vector.load %arg7[%c0_61, %c0_62] : memref<8x32xf32, #tpu.memory_space<vmem>>, vector<8x32xf32>
    %cst_63 = arith.constant dense<0.000000e+00> : vector<8x128xf32>
    %141 = tpu.matmul %140, %139, %cst_63 {dimension_numbers = #tpu.dot_dimension_numbers<[1], [0], [0], [1], [0, 0, 1, 1], [], []>} : vector<8x32xf32>, vector<32x128xf32>, vector<8x128xf32> -> vector<8x128xf32>
    %c0_64 = arith.constant 0 : index
    %c0_65 = arith.constant 0 : index
    %142 = vector.load %arg8[%c0_64, %c0_65] : memref<8x1xf32, #tpu.memory_space<vmem>>, vector<8x1xf32>
    %143 = vector.broadcast %142 : vector<8x1xf32> to vector<8x128xf32>
    %144 = arith.addf %141, %143 : vector<8x128xf32>
    %145 = arith.mulf %144, %144 : vector<8x128xf32>
    %cst_66 = arith.constant dense<0.000000e+00> : vector<128xf32>
    %146 = vector.multi_reduction <add>, %145, %cst_66 [0] : vector<8x128xf32> to vector<128xf32>
    %147 = vector.shape_cast %146 : vector<128xf32> to vector<1x128xf32>
    %cst_67 = arith.constant 1.000000e-24 : f32
    %148 = vector.broadcast %cst_67 : f32 to vector<1x128xf32>
    %149 = arith.maximumf %147, %148 : vector<1x128xf32>
    %150 = math.rsqrt %149 : vector<1x128xf32>
    %151 = vector.broadcast %150 : vector<1x128xf32> to vector<8x128xf32>
    %152 = arith.mulf %144, %151 : vector<8x128xf32>
    %153 = vector.extract_strided_slice %152 {offsets = [0, 0], sizes = [1, 128], strides = [1, 1]} : vector<8x128xf32> to vector<1x128xf32>
    %c0_68 = arith.constant 0 : index
    %c0_69 = arith.constant 0 : index
    %154 = vector.load %arg10[%c0_68, %c0_69] : memref<512x128xf32, #tpu.memory_space<vmem>>, vector<64x128xf32>
    %155 = vector.broadcast %153 : vector<1x128xf32> to vector<64x128xf32>
    %156 = arith.mulf %155, %154 : vector<64x128xf32>
    %157 = vector.extract_strided_slice %152 {offsets = [1, 0], sizes = [1, 128], strides = [1, 1]} : vector<8x128xf32> to vector<1x128xf32>
    %c64 = arith.constant 64 : index
    %c0_70 = arith.constant 0 : index
    %158 = vector.load %arg10[%c64, %c0_70] : memref<512x128xf32, #tpu.memory_space<vmem>>, vector<64x128xf32>
    %159 = vector.broadcast %157 : vector<1x128xf32> to vector<64x128xf32>
    %160 = arith.mulf %159, %158 : vector<64x128xf32>
    %161 = arith.addf %156, %160 : vector<64x128xf32>
    %162 = vector.extract_strided_slice %152 {offsets = [2, 0], sizes = [1, 128], strides = [1, 1]} : vector<8x128xf32> to vector<1x128xf32>
    %c128_71 = arith.constant 128 : index
    %c0_72 = arith.constant 0 : index
    %163 = vector.load %arg10[%c128_71, %c0_72] : memref<512x128xf32, #tpu.memory_space<vmem>>, vector<64x128xf32>
    %164 = vector.broadcast %162 : vector<1x128xf32> to vector<64x128xf32>
    %165 = arith.mulf %164, %163 : vector<64x128xf32>
    %166 = arith.addf %161, %165 : vector<64x128xf32>
    %167 = vector.extract_strided_slice %152 {offsets = [3, 0], sizes = [1, 128], strides = [1, 1]} : vector<8x128xf32> to vector<1x128xf32>
    %c192 = arith.constant 192 : index
    %c0_73 = arith.constant 0 : index
    %168 = vector.load %arg10[%c192, %c0_73] : memref<512x128xf32, #tpu.memory_space<vmem>>, vector<64x128xf32>
    %169 = vector.broadcast %167 : vector<1x128xf32> to vector<64x128xf32>
    %170 = arith.mulf %169, %168 : vector<64x128xf32>
    %171 = arith.addf %166, %170 : vector<64x128xf32>
    %172 = vector.extract_strided_slice %152 {offsets = [4, 0], sizes = [1, 128], strides = [1, 1]} : vector<8x128xf32> to vector<1x128xf32>
    %c256_74 = arith.constant 256 : index
    %c0_75 = arith.constant 0 : index
    %173 = vector.load %arg10[%c256_74, %c0_75] : memref<512x128xf32, #tpu.memory_space<vmem>>, vector<64x128xf32>
    %174 = vector.broadcast %172 : vector<1x128xf32> to vector<64x128xf32>
    %175 = arith.mulf %174, %173 : vector<64x128xf32>
    %176 = arith.addf %171, %175 : vector<64x128xf32>
    %177 = vector.extract_strided_slice %152 {offsets = [5, 0], sizes = [1, 128], strides = [1, 1]} : vector<8x128xf32> to vector<1x128xf32>
    %c320 = arith.constant 320 : index
    %c0_76 = arith.constant 0 : index
    %178 = vector.load %arg10[%c320, %c0_76] : memref<512x128xf32, #tpu.memory_space<vmem>>, vector<64x128xf32>
    %179 = vector.broadcast %177 : vector<1x128xf32> to vector<64x128xf32>
    %180 = arith.mulf %179, %178 : vector<64x128xf32>
    %181 = arith.addf %176, %180 : vector<64x128xf32>
    %182 = vector.extract_strided_slice %152 {offsets = [6, 0], sizes = [1, 128], strides = [1, 1]} : vector<8x128xf32> to vector<1x128xf32>
    %c384_77 = arith.constant 384 : index
    %c0_78 = arith.constant 0 : index
    %183 = vector.load %arg10[%c384_77, %c0_78] : memref<512x128xf32, #tpu.memory_space<vmem>>, vector<64x128xf32>
    %184 = vector.broadcast %182 : vector<1x128xf32> to vector<64x128xf32>
    %185 = arith.mulf %184, %183 : vector<64x128xf32>
    %186 = arith.addf %181, %185 : vector<64x128xf32>
    %187 = vector.extract_strided_slice %152 {offsets = [7, 0], sizes = [1, 128], strides = [1, 1]} : vector<8x128xf32> to vector<1x128xf32>
    %c448 = arith.constant 448 : index
    %c0_79 = arith.constant 0 : index
    %188 = vector.load %arg10[%c448, %c0_79] : memref<512x128xf32, #tpu.memory_space<vmem>>, vector<64x128xf32>
    %189 = vector.broadcast %187 : vector<1x128xf32> to vector<64x128xf32>
    %190 = arith.mulf %189, %188 : vector<64x128xf32>
    %191 = arith.addf %186, %190 : vector<64x128xf32>
    %c0_80 = arith.constant 0 : index
    %c0_81 = arith.constant 0 : index
    %192 = vector.load %arg9[%c0_80, %c0_81] : memref<64x128xf32, #tpu.memory_space<vmem>>, vector<64x128xf32>
    tpu.vector_store %arg9[%c0_80, %c0_81], %191 {strides = array<i32>} : memref<64x128xf32, #tpu.memory_space<vmem>>, vector<64x128xf32>,
    return
  }
  func.func @transform_0(%arg0: i32) -> (i32, i32) {
    %c0_i32 = arith.constant 0 : i32
    %c0_i32_0 = arith.constant 0 : i32
    return %arg0, %c0_i32 : i32, i32
  }
  func.func @transform_1(%arg0: i32) -> (i32, i32) {
    %c0_i32 = arith.constant 0 : i32
    %c0_i32_0 = arith.constant 0 : i32
    %c0_i32_1 = arith.constant 0 : i32
    return %c0_i32, %c0_i32_0 : i32, i32
  }
  func.func @transform_2(%arg0: i32) -> (i32, i32) {
    %c0_i32 = arith.constant 0 : i32
    %c0_i32_0 = arith.constant 0 : i32
    %c0_i32_1 = arith.constant 0 : i32
    return %c0_i32, %c0_i32_0 : i32, i32
  }
  func.func @transform_3(%arg0: i32) -> (i32, i32) {
    %c0_i32 = arith.constant 0 : i32
    %c0_i32_0 = arith.constant 0 : i32
    %c0_i32_1 = arith.constant 0 : i32
    return %c0_i32, %c0_i32_0 : i32, i32
  }
  func.func @transform_4(%arg0: i32) -> (i32, i32) {
    %c0_i32 = arith.constant 0 : i32
    %c0_i32_0 = arith.constant 0 : i32
    %c0_i32_1 = arith.constant 0 : i32
    return %c0_i32, %c0_i32_0 : i32, i32
  }
  func.func @transform_5(%arg0: i32) -> (i32, i32) {
    %c0_i32 = arith.constant 0 : i32
    %c0_i32_0 = arith.constant 0 : i32
    %c0_i32_1 = arith.constant 0 : i32
    return %c0_i32, %c0_i32_0 : i32, i32
  }
  func.func @transform_6(%arg0: i32) -> (i32, i32) {
    %c0_i32 = arith.constant 0 : i32
    %c0_i32_0 = arith.constant 0 : i32
    %c0_i32_1 = arith.constant 0 : i32
    return %c0_i32, %c0_i32_0 : i32, i32
  }
  func.func @transform_7(%arg0: i32) -> (i32, i32) {
    %c0_i32 = arith.constant 0 : i32
    %c0_i32_0 = arith.constant 0 : i32
    %c0_i32_1 = arith.constant 0 : i32
    return %c0_i32, %c0_i32_0 : i32, i32
  }
  func.func @transform_8(%arg0: i32) -> (i32, i32) {
    %c0_i32 = arith.constant 0 : i32
    %c0_i32_0 = arith.constant 0 : i32
    return %c0_i32, %arg0 : i32, i32
  }
}

</mosaic_0001>

<llo_original>
// kernel: tpu_custom_call.1
$region0: #{tpu_custom_call.1}
  #allocation0 [shape = 'u32[]', space=smem, size = 0x4, offset = 0x4, fixed_abs, tag = 'smem constant byte address 0x4 - core index']
  #allocation1 [shape = 'u32[72,128]{1,0:T(1,128)}', space=vmem, size = 0x9000, scoped, tag = 'internal scratch']
  #allocation2 [shape = 'f32[512,128]{1,0:T(8,128)}', space=vmem, size = 0x40000, scoped, tag = 'scratch operand']
  %s0 = inlined_call_operand.hbm [shape: f32[128,512], index: 0, kind: input, shape index: {}]
  %s1 = inlined_call_operand.vmem [shape: f32[32,32], index: 1, kind: input, shape index: {}]
  %s2 = inlined_call_operand.vmem [shape: f32[32,64], index: 2, kind: input, shape index: {}]
  %s3 = inlined_call_operand.vmem [shape: f32[32,1], index: 3, kind: input, shape index: {}]
  %s4 = inlined_call_operand.hbm [shape: f32[32,32], index: 4, kind: input, shape index: {}]
  %s5 = inlined_call_operand.vmem [shape: f32[32,1], index: 5, kind: input, shape index: {}]
  %s6 = inlined_call_operand.vmem [shape: f32[8,32], index: 6, kind: input, shape index: {}]
  %s7 = inlined_call_operand.vmem [shape: f32[8,1], index: 7, kind: input, shape index: {}]
  %s8 = inlined_call_operand.hbm [shape: f32[64,128], index: 8, kind: output, shape index: {}]
  %s9 = sld [smem:[#allocation0]]
  $region50: #{tpu_custom_call.1} parent=0
    _
  %s11 = ssub.s32 1, %s9
  %s12 = scalar_select 0, %s11, %s9
  $region1: #{tpu_custom_call.1} parent=0
    #allocation3 [shape = 'u8[262144]{0}', space=vmem, size = 0x40000, scoped, tag = 'input window, operand 0, single buffered']
    #allocation4 [shape = 's32[1]{0}', space=sflag, size = 0x4, scoped, tag = 'scoped memory for tpu_custom_call.1']
    #allocation5 [shape = 's32[1]{0}', space=sflag, size = 0x4, scoped, tag = 'scoped memory for tpu_custom_call.1']
    #allocation6 [shape = 'u8[16384]{0}', space=vmem, size = 0x4000, scoped, tag = 'input window, operand 4, single buffered']
    #allocation7 [shape = 's32[1]{0}', space=sflag, size = 0x4, scoped, tag = 'scoped memory for tpu_custom_call.1']
    #allocation8 [shape = 'u8[32768]{0}', space=vmem, size = 0x8000, scoped, tag = 'output window, operand 0, single buffered']
    %13 = vsyncpa [#allocation4], 0
    %14 = vsyncpa [#allocation7], 0
    %15 = vsyncpa [#allocation5], 0
    // Predicated region
    $region2: #{tpu_custom_call.1} parent=1 // pred_check
      _
    $region3: #{tpu_custom_call.1} parent=1 // pred_check_branch
      %17 = sbr.rel (0) target = $region5
    $region4: #{tpu_custom_call.1} parent=1 // pred_region
      %19 = vsyncadd [#allocation4], 0
      %s20 = sshll.u32 %s0, 4
      %s21 = int_to_ptr.hbm [resolvable:$true] %s20
      %s22 = sshll.u32 [#allocation3], 4
      %s23 = int_to_ptr.vmem [resolvable:$true] %s22
      %28 = dma.hbm_to_vmem [thread:$0]  %s21, 8192, %s23, [#allocation4], 512, 512, 32
    $region5: #{tpu_custom_call.1} parent=1 // pred_fallthru
      _
    // Predicated region
    $region6: #{tpu_custom_call.1} parent=1 // pred_check
      _
    $region7: #{tpu_custom_call.1} parent=1 // pred_check_branch
      %30 = sbr.rel (0) target = $region9
    $region8: #{tpu_custom_call.1} parent=1 // pred_region
      _
    $region9: #{tpu_custom_call.1} parent=1 // pred_fallthru
      _
    // Predicated region
    $region10: #{tpu_custom_call.1} parent=1 // pred_check
      _
    $region11: #{tpu_custom_call.1} parent=1 // pred_check_branch
      %32 = sbr.rel (0) target = $region13
    $region12: #{tpu_custom_call.1} parent=1 // pred_region
      _
    $region13: #{tpu_custom_call.1} parent=1 // pred_fallthru
      _
    // Predicated region
    $region14: #{tpu_custom_call.1} parent=1 // pred_check
      _
    $region15: #{tpu_custom_call.1} parent=1 // pred_check_branch
      %34 = sbr.rel (0) target = $region17
    $region16: #{tpu_custom_call.1} parent=1 // pred_region
      _
    $region17: #{tpu_custom_call.1} parent=1 // pred_fallthru
      _
    // Predicated region
    $region18: #{tpu_custom_call.1} parent=1 // pred_check
      _
    $region19: #{tpu_custom_call.1} parent=1 // pred_check_branch
      %36 = sbr.rel (0) target = $region21
    $region20: #{tpu_custom_call.1} parent=1 // pred_region
      %38 = vsyncadd [#allocation7], 0
      %s39 = sshll.u32 %s4, 4
      %s40 = int_to_ptr.hbm [resolvable:$true] %s39
      %s41 = sshll.u32 [#allocation6], 4
      %s42 = int_to_ptr.vmem [resolvable:$true] %s41
      %47 = dma.hbm_to_vmem [thread:$0]  %s40, 512, %s42, [#allocation7], 128, 128, 8
    $region21: #{tpu_custom_call.1} parent=1 // pred_fallthru
      _
    // Predicated region
    $region22: #{tpu_custom_call.1} parent=1 // pred_check
      _
    $region23: #{tpu_custom_call.1} parent=1 // pred_check_branch
      %49 = sbr.rel (0) target = $region25
    $region24: #{tpu_custom_call.1} parent=1 // pred_region
      _
    $region25: #{tpu_custom_call.1} parent=1 // pred_fallthru
      _
    // Predicated region
    $region26: #{tpu_custom_call.1} parent=1 // pred_check
      _
    $region27: #{tpu_custom_call.1} parent=1 // pred_check_branch
      %51 = sbr.rel (0) target = $region29
    $region28: #{tpu_custom_call.1} parent=1 // pred_region
      _
    $region29: #{tpu_custom_call.1} parent=1 // pred_fallthru
      _
    // Predicated region
    $region30: #{tpu_custom_call.1} parent=1 // pred_check
      _
    $region31: #{tpu_custom_call.1} parent=1 // pred_check_branch
      %53 = sbr.rel (0) target = $region33
    $region32: #{tpu_custom_call.1} parent=1 // pred_region
      _
    $region33: #{tpu_custom_call.1} parent=1 // pred_fallthru
      _
    // Predicated region
    $region34: #{tpu_custom_call.1} parent=1 // pred_check
      _
    $region35: #{tpu_custom_call.1} parent=1 // pred_check_branch
      %55 = sbr.rel (0) target = $region37
    $region36: #{tpu_custom_call.1} parent=1 // pred_region
      %57 = dma.done [#allocation4], 8192
    $region37: #{tpu_custom_call.1} parent=1 // pred_fallthru
      _
    // Predicated region
    $region38: #{tpu_custom_call.1} parent=1 // pred_check
      _
    $region39: #{tpu_custom_call.1} parent=1 // pred_check_branch
      %59 = sbr.rel (0) target = $region41
    $region40: #{tpu_custom_call.1} parent=1 // pred_region
      %61 = dma.done [#allocation7], 512
    $region41: #{tpu_custom_call.1} parent=1 // pred_fallthru
      _
    %v62 = vld [vmem:[#allocation3] sm:$0xff]
    %v63 = vld [vmem:[#allocation3 + $0x20] sm:$0xff]
    %v64 = vld [vmem:[#allocation3 + $0x40] sm:$0xff]
    %v65 = vld [vmem:[#allocation3 + $0x60] sm:$0xff]
    %v66 = vld [vmem:[#allocation3 + $0x80] sm:$0xff]
    %v67 = vld [vmem:[#allocation3 + $0xa0] sm:$0xff]
    %v68 = vld [vmem:[#allocation3 + $0xc0] sm:$0xff]
    %v69 = vld [vmem:[#allocation3 + $0xe0] sm:$0xff]
    %v70 = vld [vmem:[#allocation3 + $0x100] sm:$0xff]
    %v71 = vld [vmem:[#allocation3 + $0x120] sm:$0xff]
    %v72 = vld [vmem:[#allocation3 + $0x140] sm:$0xff]
    %v73 = vld [vmem:[#allocation3 + $0x160] sm:$0xff]
    %v74 = vld [vmem:[#allocation3 + $0x180] sm:$0xff]
    %v75 = vld [vmem:[#allocation3 + $0x1a0] sm:$0xff]
    %v76 = vld [vmem:[#allocation3 + $0x1c0] sm:$0xff]
    %v77 = vld [vmem:[#allocation3 + $0x1e0] sm:$0xff]
    %78 = vxpose.xlu0.b32.start [1/16] %v62, 128
    %79 = vxpose.xlu0.b32.cont [2/16] %v63, 128
    %80 = vxpose.xlu0.b32.cont [3/16] %v64, 128
    %81 = vxpose.xlu0.b32.cont [4/16] %v65, 128
    %82 = vxpose.xlu0.b32.cont [5/16] %v66, 128
    %83 = vxpose.xlu0.b32.cont [6/16] %v67, 128
    %84 = vxpose.xlu0.b32.cont [7/16] %v68, 128
    %85 = vxpose.xlu0.b32.cont [8/16] %v69, 128
    %86 = vxpose.xlu0.b32.cont [9/16] %v70, 128
    %87 = vxpose.xlu0.b32.cont [10/16] %v71, 128
    %88 = vxpose.xlu0.b32.cont [11/16] %v72, 128
    %89 = vxpose.xlu0.b32.cont [12/16] %v73, 128
    %90 = vxpose.xlu0.b32.cont [13/16] %v74, 128
    %91 = vxpose.xlu0.b32.cont [14/16] %v75, 128
    %92 = vxpose.xlu0.b32.cont [15/16] %v76, 128
    %93 = vxpose.xlu0.b32.end [16/16] %v77, 128
    %v94 = vpop.trf.xlu0
    %v95 = vpop.trf.xlu0
    %v96 = vpop.trf.xlu0
    %v97 = vpop.trf.xlu0
    %v98 = vpop.trf.xlu0
    %v99 = vpop.trf.xlu0
    %v100 = vpop.trf.xlu0
    %v101 = vpop.trf.xlu0
    %v102 = vpop.trf.xlu0
    %v103 = vpop.trf.xlu0
    %v104 = vpop.trf.xlu0
    %v105 = vpop.trf.xlu0
    %v106 = vpop.trf.xlu0
    %v107 = vpop.trf.xlu0
    %v108 = vpop.trf.xlu0
    %v109 = vpop.trf.xlu0
    %110 = vst [vmem:[#allocation2] sm:$0xff] %v94
    %111 = vst [vmem:[#allocation2 + $0x8] sm:$0xff] %v95
    %112 = vst [vmem:[#allocation2 + $0x10] sm:$0xff] %v96
    %113 = vst [vmem:[#allocation2 + $0x18] sm:$0xff] %v97
    %114 = vst [vmem:[#allocation2 + $0x20] sm:$0xff] %v98
    %115 = vst [vmem:[#allocation2 + $0x28] sm:$0xff] %v99
    %116 = vst [vmem:[#allocation2 + $0x30] sm:$0xff] %v100
    %117 = vst [vmem:[#allocation2 + $0x38] sm:$0xff] %v101
    %118 = vst [vmem:[#allocation2 + $0x40] sm:$0xff] %v102
    %119 = vst [vmem:[#allocation2 + $0x48] sm:$0xff] %v103
    %120 = vst [vmem:[#allocation2 + $0x50] sm:$0xff] %v104
    %121 = vst [vmem:[#allocation2 + $0x58] sm:$0xff] %v105
    %122 = vst [vmem:[#allocation2 + $0x60] sm:$0xff] %v106
    %123 = vst [vmem:[#allocation2 + $0x68] sm:$0xff] %v107
    %124 = vst [vmem:[#allocation2 + $0x70] sm:$0xff] %v108
    %125 = vst [vmem:[#allocation2 + $0x78] sm:$0xff] %v109
    %v126 = vld [vmem:[#allocation3 + $0x8] sm:$0xff]
    %v127 = vld [vmem:[#allocation3 + $0x28] sm:$0xff]
    %v128 = vld [vmem:[#allocation3 + $0x48] sm:$0xff]
    %v129 = vld [vmem:[#allocation3 + $0x68] sm:$0xff]
    %v130 = vld [vmem:[#allocation3 + $0x88] sm:$0xff]
    %v131 = vld [vmem:[#allocation3 + $0xa8] sm:$0xff]
    %v132 = vld [vmem:[#allocation3 + $0xc8] sm:$0xff]
    %v133 = vld [vmem:[#allocation3 + $0xe8] sm:$0xff]
    %v134 = vld [vmem:[#allocation3 + $0x108] sm:$0xff]
    %v135 = vld [vmem:[#allocation3 + $0x128] sm:$0xff]
    %v136 = vld [vmem:[#allocation3 + $0x148] sm:$0xff]
    %v137 = vld [vmem:[#allocation3 + $0x168] sm:$0xff]
    %v138 = vld [vmem:[#allocation3 + $0x188] sm:$0xff]
    %v139 = vld [vmem:[#allocation3 + $0x1a8] sm:$0xff]
    %v140 = vld [vmem:[#allocation3 + $0x1c8] sm:$0xff]
    %v141 = vld [vmem:[#allocation3 + $0x1e8] sm:$0xff]
    %142 = vxpose.xlu0.b32.start [1/16] %v126, 128
    %143 = vxpose.xlu0.b32.cont [2/16] %v127, 128
    %144 = vxpose.xlu0.b32.cont [3/16] %v128, 128
    %145 = vxpose.xlu0.b32.cont [4/16] %v129, 128
    %146 = vxpose.xlu0.b32.cont [5/16] %v130, 128
    %147 = vxpose.xlu0.b32.cont [6/16] %v131, 128
    %148 = vxpose.xlu0.b32.cont [7/16] %v132, 128
    %149 = vxpose.xlu0.b32.cont [8/16] %v133, 128
    %150 = vxpose.xlu0.b32.cont [9/16] %v134, 128
    %151 = vxpose.xlu0.b32.cont [10/16] %v135, 128
    %152 = vxpose.xlu0.b32.cont [11/16] %v136, 128
    %153 = vxpose.xlu0.b32.cont [12/16] %v137, 128
    %154 = vxpose.xlu0.b32.cont [13/16] %v138, 128
    %155 = vxpose.xlu0.b32.cont [14/16] %v139, 128
    %156 = vxpose.xlu0.b32.cont [15/16] %v140, 128
    %157 = vxpose.xlu0.b32.end [16/16] %v141, 128
    %v158 = vpop.trf.xlu0
    %v159 = vpop.trf.xlu0
    %v160 = vpop.trf.xlu0
    %v161 = vpop.trf.xlu0
    %v162 = vpop.trf.xlu0
    %v163 = vpop.trf.xlu0
    %v164 = vpop.trf.xlu0
    %v165 = vpop.trf.xlu0
    %v166 = vpop.trf.xlu0
    %v167 = vpop.trf.xlu0
    %v168 = vpop.trf.xlu0
    %v169 = vpop.trf.xlu0
    %v170 = vpop.trf.xlu0
    %v171 = vpop.trf.xlu0
    %v172 = vpop.trf.xlu0
    %v173 = vpop.trf.xlu0
    %174 = vst [vmem:[#allocation2 + $0x80] sm:$0xff] %v158
    %175 = vst [vmem:[#allocation2 + $0x88] sm:$0xff] %v159
    %176 = vst [vmem:[#allocation2 + $0x90] sm:$0xff] %v160
    %177 = vst [vmem:[#allocation2 + $0x98] sm:$0xff] %v161
    %178 = vst [vmem:[#allocation2 + $0xa0] sm:$0xff] %v162
    %179 = vst [vmem:[#allocation2 + $0xa8] sm:$0xff] %v163
    %180 = vst [vmem:[#allocation2 + $0xb0] sm:$0xff] %v164
    %181 = vst [vmem:[#allocation2 + $0xb8] sm:$0xff] %v165
    %182 = vst [vmem:[#allocation2 + $0xc0] sm:$0xff] %v166
    %183 = vst [vmem:[#allocation2 + $0xc8] sm:$0xff] %v167
    %184 = vst [vmem:[#allocation2 + $0xd0] sm:$0xff] %v168
    %185 = vst [vmem:[#allocation2 + $0xd8] sm:$0xff] %v169
    %186 = vst [vmem:[#allocation2 + $0xe0] sm:$0xff] %v170
    %187 = vst [vmem:[#allocation2 + $0xe8] sm:$0xff] %v171
    %188 = vst [vmem:[#allocation2 + $0xf0] sm:$0xff] %v172
    %189 = vst [vmem:[#allocation2 + $0xf8] sm:$0xff] %v173
    %v190 = vld [vmem:[#allocation3 + $0x10] sm:$0xff]
    %v191 = vld [vmem:[#allocation3 + $0x30] sm:$0xff]
    %v192 = vld [vmem:[#allocation3 + $0x50] sm:$0xff]
    %v193 = vld [vmem:[#allocation3 + $0x70] sm:$0xff]
    %v194 = vld [vmem:[#allocation3 + $0x90] sm:$0xff]
    %v195 = vld [vmem:[#allocation3 + $0xb0] sm:$0xff]
    %v196 = vld [vmem:[#allocation3 + $0xd0] sm:$0xff]
    %v197 = vld [vmem:[#allocation3 + $0xf0] sm:$0xff]
    %v198 = vld [vmem:[#allocation3 + $0x110] sm:$0xff]
    %v199 = vld [vmem:[#allocation3 + $0x130] sm:$0xff]
    %v200 = vld [vmem:[#allocation3 + $0x150] sm:$0xff]
    %v201 = vld [vmem:[#allocation3 + $0x170] sm:$0xff]
    %v202 = vld [vmem:[#allocation3 + $0x190] sm:$0xff]
    %v203 = vld [vmem:[#allocation3 + $0x1b0] sm:$0xff]
    %v204 = vld [vmem:[#allocation3 + $0x1d0] sm:$0xff]
    %v205 = vld [vmem:[#allocation3 + $0x1f0] sm:$0xff]
    %206 = vxpose.xlu0.b32.start [1/16] %v190, 128
    %207 = vxpose.xlu0.b32.cont [2/16] %v191, 128
    %208 = vxpose.xlu0.b32.cont [3/16] %v192, 128
    %209 = vxpose.xlu0.b32.cont [4/16] %v193, 128
    %210 = vxpose.xlu0.b32.cont [5/16] %v194, 128
    %211 = vxpose.xlu0.b32.cont [6/16] %v195, 128
    %212 = vxpose.xlu0.b32.cont [7/16] %v196, 128
    %213 = vxpose.xlu0.b32.cont [8/16] %v197, 128
    %214 = vxpose.xlu0.b32.cont [9/16] %v198, 128
    %215 = vxpose.xlu0.b32.cont [10/16] %v199, 128
    %216 = vxpose.xlu0.b32.cont [11/16] %v200, 128
    %217 = vxpose.xlu0.b32.cont [12/16] %v201, 128
    %218 = vxpose.xlu0.b32.cont [13/16] %v202, 128
    %219 = vxpose.xlu0.b32.cont [14/16] %v203, 128
    %220 = vxpose.xlu0.b32.cont [15/16] %v204, 128
    %221 = vxpose.xlu0.b32.end [16/16] %v205, 128
    %v222 = vpop.trf.xlu0
    %v223 = vpop.trf.xlu0
    %v224 = vpop.trf.xlu0
    %v225 = vpop.trf.xlu0
    %v226 = vpop.trf.xlu0
    %v227 = vpop.trf.xlu0
    %v228 = vpop.trf.xlu0
    %v229 = vpop.trf.xlu0
    %v230 = vpop.trf.xlu0
    %v231 = vpop.trf.xlu0
    %v232 = vpop.trf.xlu0
    %v233 = vpop.trf.xlu0
    %v234 = vpop.trf.xlu0
    %v235 = vpop.trf.xlu0
    %v236 = vpop.trf.xlu0
    %v237 = vpop.trf.xlu0
    %238 = vst [vmem:[#allocation2 + $0x100] sm:$0xff] %v222
    %239 = vst [vmem:[#allocation2 + $0x108] sm:$0xff] %v223
    %240 = vst [vmem:[#allocation2 + $0x110] sm:$0xff] %v224
    %241 = vst [vmem:[#allocation2 + $0x118] sm:$0xff] %v225
    %242 = vst [vmem:[#allocation2 + $0x120] sm:$0xff] %v226
    %243 = vst [vmem:[#allocation2 + $0x128] sm:$0xff] %v227
    %244 = vst [vmem:[#allocation2 + $0x130] sm:$0xff] %v228
    %245 = vst [vmem:[#allocation2 + $0x138] sm:$0xff] %v229
    %246 = vst [vmem:[#allocation2 + $0x140] sm:$0xff] %v230
    %247 = vst [vmem:[#allocation2 + $0x148] sm:$0xff] %v231
    %248 = vst [vmem:[#allocation2 + $0x150] sm:$0xff] %v232
    %249 = vst [vmem:[#allocation2 + $0x158] sm:$0xff] %v233
    %250 = vst [vmem:[#allocation2 + $0x160] sm:$0xff] %v234
    %251 = vst [vmem:[#allocation2 + $0x168] sm:$0xff] %v235
    %252 = vst [vmem:[#allocation2 + $0x170] sm:$0xff] %v236
    %253 = vst [vmem:[#allocation2 + $0x178] sm:$0xff] %v237
    %v254 = vld [vmem:[#allocation3 + $0x18] sm:$0xff]
    %v255 = vld [vmem:[#allocation3 + $0x38] sm:$0xff]
    %v256 = vld [vmem:[#allocation3 + $0x58] sm:$0xff]
    %v257 = vld [vmem:[#allocation3 + $0x78] sm:$0xff]
    %v258 = vld [vmem:[#allocation3 + $0x98] sm:$0xff]
    %v259 = vld [vmem:[#allocation3 + $0xb8] sm:$0xff]
    %v260 = vld [vmem:[#allocation3 + $0xd8] sm:$0xff]
    %v261 = vld [vmem:[#allocation3 + $0xf8] sm:$0xff]
    %v262 = vld [vmem:[#allocation3 + $0x118] sm:$0xff]
    %v263 = vld [vmem:[#allocation3 + $0x138] sm:$0xff]
    %v264 = vld [vmem:[#allocation3 + $0x158] sm:$0xff]
    %v265 = vld [vmem:[#allocation3 + $0x178] sm:$0xff]
    %v266 = vld [vmem:[#allocation3 + $0x198] sm:$0xff]
    %v267 = vld [vmem:[#allocation3 + $0x1b8] sm:$0xff]
    %v268 = vld [vmem:[#allocation3 + $0x1d8] sm:$0xff]
    %v269 = vld [vmem:[#allocation3 + $0x1f8] sm:$0xff]
    %270 = vxpose.xlu0.b32.start [1/16] %v254, 128
    %271 = vxpose.xlu0.b32.cont [2/16] %v255, 128
    %272 = vxpose.xlu0.b32.cont [3/16] %v256, 128
    %273 = vxpose.xlu0.b32.cont [4/16] %v257, 128
    %274 = vxpose.xlu0.b32.cont [5/16] %v258, 128
    %275 = vxpose.xlu0.b32.cont [6/16] %v259, 128
    %276 = vxpose.xlu0.b32.cont [7/16] %v260, 128
    %277 = vxpose.xlu0.b32.cont [8/16] %v261, 128
    %278 = vxpose.xlu0.b32.cont [9/16] %v262, 128
    %279 = vxpose.xlu0.b32.cont [10/16] %v263, 128
    %280 = vxpose.xlu0.b32.cont [11/16] %v264, 128
    %281 = vxpose.xlu0.b32.cont [12/16] %v265, 128
    %282 = vxpose.xlu0.b32.cont [13/16] %v266, 128
    %283 = vxpose.xlu0.b32.cont [14/16] %v267, 128
    %284 = vxpose.xlu0.b32.cont [15/16] %v268, 128
    %285 = vxpose.xlu0.b32.end [16/16] %v269, 128
    %v286 = vpop.trf.xlu0
    %v287 = vpop.trf.xlu0
    %v288 = vpop.trf.xlu0
    %v289 = vpop.trf.xlu0
    %v290 = vpop.trf.xlu0
    %v291 = vpop.trf.xlu0
    %v292 = vpop.trf.xlu0
    %v293 = vpop.trf.xlu0
    %v294 = vpop.trf.xlu0
    %v295 = vpop.trf.xlu0
    %v296 = vpop.trf.xlu0
    %v297 = vpop.trf.xlu0
    %v298 = vpop.trf.xlu0
    %v299 = vpop.trf.xlu0
    %v300 = vpop.trf.xlu0
    %v301 = vpop.trf.xlu0
    %302 = vst [vmem:[#allocation2 + $0x180] sm:$0xff] %v286
    %303 = vst [vmem:[#allocation2 + $0x188] sm:$0xff] %v287
    %304 = vst [vmem:[#allocation2 + $0x190] sm:$0xff] %v288
    %305 = vst [vmem:[#allocation2 + $0x198] sm:$0xff] %v289
    %306 = vst [vmem:[#allocation2 + $0x1a0] sm:$0xff] %v290
    %307 = vst [vmem:[#allocation2 + $0x1a8] sm:$0xff] %v291
    %308 = vst [vmem:[#allocation2 + $0x1b0] sm:$0xff] %v292
    %309 = vst [vmem:[#allocation2 + $0x1b8] sm:$0xff] %v293
    %310 = vst [vmem:[#allocation2 + $0x1c0] sm:$0xff] %v294
    %311 = vst [vmem:[#allocation2 + $0x1c8] sm:$0xff] %v295
    %312 = vst [vmem:[#allocation2 + $0x1d0] sm:$0xff] %v296
    %313 = vst [vmem:[#allocation2 + $0x1d8] sm:$0xff] %v297
    %314 = vst [vmem:[#allocation2 + $0x1e0] sm:$0xff] %v298
    %315 = vst [vmem:[#allocation2 + $0x1e8] sm:$0xff] %v299
    %316 = vst [vmem:[#allocation2 + $0x1f0] sm:$0xff] %v300
    %317 = vst [vmem:[#allocation2 + $0x1f8] sm:$0xff] %v301
    %v318 = vld [vmem:[#allocation2] ss:$16 sm:$0x3]
    %v319 = vld [vmem:[#allocation2] ss:$16 sm:$0xc]
    %v320 = vor.u32 %v318, %v319
    %v321 = vld [vmem:[#allocation2] ss:$16 sm:$0x30]
    %v322 = vor.u32 %v320, %v321
    %v323 = vld [vmem:[#allocation2] ss:$16 sm:$0xc0]
    %v324 = vor.u32 %v322, %v323
    %s325 = scalar_lea.vmem [#allocation2], 128
    %v326 = vld [vmem:[%s325] ss:$16 sm:$0x3]
    %v327 = vld [vmem:[%s325] ss:$16 sm:$0xc]
    %v328 = vor.u32 %v326, %v327
    %v329 = vld [vmem:[%s325] ss:$16 sm:$0x30]
    %v330 = vor.u32 %v328, %v329
    %v331 = vld [vmem:[%s325] ss:$16 sm:$0xc0]
    %v332 = vor.u32 %v330, %v331
    %s333 = scalar_lea.vmem [#allocation2], 256
    %v334 = vld [vmem:[%s333] ss:$16 sm:$0x3]
    %v335 = vld [vmem:[%s333] ss:$16 sm:$0xc]
    %v336 = vor.u32 %v334, %v335
    %v337 = vld [vmem:[%s333] ss:$16 sm:$0x30]
    %v338 = vor.u32 %v336, %v337
    %v339 = vld [vmem:[%s333] ss:$16 sm:$0xc0]
    %v340 = vor.u32 %v338, %v339
    %s341 = scalar_lea.vmem [#allocation2], 384
    %v342 = vld [vmem:[%s341] ss:$16 sm:$0x3]
    %v343 = vld [vmem:[%s341] ss:$16 sm:$0xc]
    %v344 = vor.u32 %v342, %v343
    %v345 = vld [vmem:[%s341] ss:$16 sm:$0x30]
    %v346 = vor.u32 %v344, %v345
    %v347 = vld [vmem:[%s341] ss:$16 sm:$0xc0]
    %v348 = vor.u32 %v346, %v347
    %v349 = vmul.f32 %v324, 0.049787063
    %v350 = vmul.f32 %v332, 0.049787063
    %v351 = vmul.f32 %v340, 0.049787063
    %v352 = vmul.f32 %v348, 0.049787063
    %s353 = scalar_lea.vmem [#allocation2], 1
    %v354 = vld [vmem:[%s353] ss:$16 sm:$0x3]
    %v355 = vld [vmem:[%s353] ss:$16 sm:$0xc]
    %v356 = vor.u32 %v354, %v355
    %v357 = vld [vmem:[%s353] ss:$16 sm:$0x30]
    %v358 = vor.u32 %v356, %v357
    %v359 = vld [vmem:[%s353] ss:$16 sm:$0xc0]
    %v360 = vor.u32 %v358, %v359
    %s361 = scalar_lea.vmem [#allocation2], 129
    %v362 = vld [vmem:[%s361] ss:$16 sm:$0x3]
    %v363 = vld [vmem:[%s361] ss:$16 sm:$0xc]
    %v364 = vor.u32 %v362, %v363
    %v365 = vld [vmem:[%s361] ss:$16 sm:$0x30]
    %v366 = vor.u32 %v364, %v365
    %v367 = vld [vmem:[%s361] ss:$16 sm:$0xc0]
    %v368 = vor.u32 %v366, %v367
    %s369 = scalar_lea.vmem [#allocation2], 257
    %v370 = vld [vmem:[%s369] ss:$16 sm:$0x3]
    %v371 = vld [vmem:[%s369] ss:$16 sm:$0xc]
    %v372 = vor.u32 %v370, %v371
    %v373 = vld [vmem:[%s369] ss:$16 sm:$0x30]
    %v374 = vor.u32 %v372, %v373
    %v375 = vld [vmem:[%s369] ss:$16 sm:$0xc0]
    %v376 = vor.u32 %v374, %v375
    %s377 = scalar_lea.vmem [#allocation2], 385
    %v378 = vld [vmem:[%s377] ss:$16 sm:$0x3]
    %v379 = vld [vmem:[%s377] ss:$16 sm:$0xc]
    %v380 = vor.u32 %v378, %v379
    %v381 = vld [vmem:[%s377] ss:$16 sm:$0x30]
    %v382 = vor.u32 %v380, %v381
    %v383 = vld [vmem:[%s377] ss:$16 sm:$0xc0]
    %v384 = vor.u32 %v382, %v383
    %v385 = vmul.f32 %v360, 0.22313015
    %v386 = vmul.f32 %v368, 0.22313015
    %v387 = vmul.f32 %v376, 0.22313015
    %v388 = vmul.f32 %v384, 0.22313015
    %v389 = vmax.f32 %v349, %v385
    %v390 = vmax.f32 %v350, %v386
    %v391 = vmax.f32 %v351, %v387
    %v392 = vmax.f32 %v352, %v388
    %s393 = scalar_lea.vmem [#allocation2], 2
    %v394 = vld [vmem:[%s393] ss:$16 sm:$0x3]
    %v395 = vld [vmem:[%s393] ss:$16 sm:$0xc]
    %v396 = vor.u32 %v394, %v395
    %v397 = vld [vmem:[%s393] ss:$16 sm:$0x30]
    %v398 = vor.u32 %v396, %v397
    %v399 = vld [vmem:[%s393] ss:$16 sm:$0xc0]
    %v400 = vor.u32 %v398, %v399
    %s401 = scalar_lea.vmem [#allocation2], 130
    %v402 = vld [vmem:[%s401] ss:$16 sm:$0x3]
    %v403 = vld [vmem:[%s401] ss:$16 sm:$0xc]
    %v404 = vor.u32 %v402, %v403
    %v405 = vld [vmem:[%s401] ss:$16 sm:$0x30]
    %v406 = vor.u32 %v404, %v405
    %v407 = vld [vmem:[%s401] ss:$16 sm:$0xc0]
    %v408 = vor.u32 %v406, %v407
    %s409 = scalar_lea.vmem [#allocation2], 258
    %v410 = vld [vmem:[%s409] ss:$16 sm:$0x3]
    %v411 = vld [vmem:[%s409] ss:$16 sm:$0xc]
    %v412 = vor.u32 %v410, %v411
    %v413 = vld [vmem:[%s409] ss:$16 sm:$0x30]
    %v414 = vor.u32 %v412, %v413
    %v415 = vld [vmem:[%s409] ss:$16 sm:$0xc0]
    %v416 = vor.u32 %v414, %v415
    %s417 = scalar_lea.vmem [#allocation2], 386
    %v418 = vld [vmem:[%s417] ss:$16 sm:$0x3]
    %v419 = vld [vmem:[%s417] ss:$16 sm:$0xc]
    %v420 = vor.u32 %v418, %v419
    %v421 = vld [vmem:[%s417] ss:$16 sm:$0x30]
    %v422 = vor.u32 %v420, %v421
    %v423 = vld [vmem:[%s417] ss:$16 sm:$0xc0]
    %v424 = vor.u32 %v422, %v423
    %v425 = vmul.f32 %v400, 0.36787942
    %v426 = vmul.f32 %v408, 0.36787942
    %v427 = vmul.f32 %v416, 0.36787942
    %v428 = vmul.f32 %v424, 0.36787942
    %v429 = vmax.f32 %v389, %v425
    %v430 = vmax.f32 %v390, %v426
    %v431 = vmax.f32 %v391, %v427
    %v432 = vmax.f32 %v392, %v428
    %s433 = scalar_lea.vmem [#allocation2], 3
    %v434 = vld [vmem:[%s433] ss:$16 sm:$0x3]
    %v435 = vld [vmem:[%s433] ss:$16 sm:$0xc]
    %v436 = vor.u32 %v434, %v435
    %v437 = vld [vmem:[%s433] ss:$16 sm:$0x30]
    %v438 = vor.u32 %v436, %v437
    %v439 = vld [vmem:[%s433] ss:$16 sm:$0xc0]
    %v440 = vor.u32 %v438, %v439
    %s441 = scalar_lea.vmem [#allocation2], 131
    %v442 = vld [vmem:[%s441] ss:$16 sm:$0x3]
    %v443 = vld [vmem:[%s441] ss:$16 sm:$0xc]
    %v444 = vor.u32 %v442, %v443
    %v445 = vld [vmem:[%s441] ss:$16 sm:$0x30]
    %v446 = vor.u32 %v444, %v445
    %v447 = vld [vmem:[%s441] ss:$16 sm:$0xc0]
    %v448 = vor.u32 %v446, %v447
    %s449 = scalar_lea.vmem [#allocation2], 259
    %v450 = vld [vmem:[%s449] ss:$16 sm:$0x3]
    %v451 = vld [vmem:[%s449] ss:$16 sm:$0xc]
    %v452 = vor.u32 %v450, %v451
    %v453 = vld [vmem:[%s449] ss:$16 sm:$0x30]
    %v454 = vor.u32 %v452, %v453
    %v455 = vld [vmem:[%s449] ss:$16 sm:$0xc0]
    %v456 = vor.u32 %v454, %v455
    %s457 = scalar_lea.vmem [#allocation2], 387
    %v458 = vld [vmem:[%s457] ss:$16 sm:$0x3]
    %v459 = vld [vmem:[%s457] ss:$16 sm:$0xc]
    %v460 = vor.u32 %v458, %v459
    %v461 = vld [vmem:[%s457] ss:$16 sm:$0x30]
    %v462 = vor.u32 %v460, %v461
    %v463 = vld [vmem:[%s457] ss:$16 sm:$0xc0]
    %v464 = vor.u32 %v462, %v463
    %v465 = vmul.f32 %v440, 0.22313015
    %v466 = vmul.f32 %v448, 0.22313015
    %v467 = vmul.f32 %v456, 0.22313015
    %v468 = vmul.f32 %v464, 0.22313015
    %v469 = vmax.f32 %v429, %v465
    %v470 = vmax.f32 %v430, %v466
    %v471 = vmax.f32 %v431, %v467
    %v472 = vmax.f32 %v432, %v468
    %s473 = scalar_lea.vmem [#allocation2], 4
    %v474 = vld [vmem:[%s473] ss:$16 sm:$0x3]
    %v475 = vld [vmem:[%s473] ss:$16 sm:$0xc]
    %v476 = vor.u32 %v474, %v475
    %v477 = vld [vmem:[%s473] ss:$16 sm:$0x30]
    %v478 = vor.u32 %v476, %v477
    %v479 = vld [vmem:[%s473] ss:$16 sm:$0xc0]
    %v480 = vor.u32 %v478, %v479
    %s481 = scalar_lea.vmem [#allocation2], 132
    %v482 = vld [vmem:[%s481] ss:$16 sm:$0x3]
    %v483 = vld [vmem:[%s481] ss:$16 sm:$0xc]
    %v484 = vor.u32 %v482, %v483
    %v485 = vld [vmem:[%s481] ss:$16 sm:$0x30]
    %v486 = vor.u32 %v484, %v485
    %v487 = vld [vmem:[%s481] ss:$16 sm:$0xc0]
    %v488 = vor.u32 %v486, %v487
    %s489 = scalar_lea.vmem [#allocation2], 260
    %v490 = vld [vmem:[%s489] ss:$16 sm:$0x3]
    %v491 = vld [vmem:[%s489] ss:$16 sm:$0xc]
    %v492 = vor.u32 %v490, %v491
    %v493 = vld [vmem:[%s489] ss:$16 sm:$0x30]
    %v494 = vor.u32 %v492, %v493
    %v495 = vld [vmem:[%s489] ss:$16 sm:$0xc0]
    %v496 = vor.u32 %v494, %v495
    %s497 = scalar_lea.vmem [#allocation2], 388
    %v498 = vld [vmem:[%s497] ss:$16 sm:$0x3]
    %v499 = vld [vmem:[%s497] ss:$16 sm:$0xc]
    %v500 = vor.u32 %v498, %v499
    %v501 = vld [vmem:[%s497] ss:$16 sm:$0x30]
    %v502 = vor.u32 %v500, %v501
    %v503 = vld [vmem:[%s497] ss:$16 sm:$0xc0]
    %v504 = vor.u32 %v502, %v503
    %v505 = vmul.f32 %v480, 0.105399214
    %v506 = vmul.f32 %v488, 0.105399214
    %v507 = vmul.f32 %v496, 0.105399214
    %v508 = vmul.f32 %v504, 0.105399214
    %v509 = vmax.f32 %v469, %v505
    %v510 = vmax.f32 %v470, %v506
    %v511 = vmax.f32 %v471, %v507
    %v512 = vmax.f32 %v472, %v508
    %s513 = scalar_lea.vmem [#allocation2], 5
    %v514 = vld [vmem:[%s513] ss:$16 sm:$0x3]
    %v515 = vld [vmem:[%s513] ss:$16 sm:$0xc]
    %v516 = vor.u32 %v514, %v515
    %v517 = vld [vmem:[%s513] ss:$16 sm:$0x30]
    %v518 = vor.u32 %v516, %v517
    %v519 = vld [vmem:[%s513] ss:$16 sm:$0xc0]
    %v520 = vor.u32 %v518, %v519
    %s521 = scalar_lea.vmem [#allocation2], 133
    %v522 = vld [vmem:[%s521] ss:$16 sm:$0x3]
    %v523 = vld [vmem:[%s521] ss:$16 sm:$0xc]
    %v524 = vor.u32 %v522, %v523
    %v525 = vld [vmem:[%s521] ss:$16 sm:$0x30]
    %v526 = vor.u32 %v524, %v525
    %v527 = vld [vmem:[%s521] ss:$16 sm:$0xc0]
    %v528 = vor.u32 %v526, %v527
    %s529 = scalar_lea.vmem [#allocation2], 261
    %v530 = vld [vmem:[%s529] ss:$16 sm:$0x3]
    %v531 = vld [vmem:[%s529] ss:$16 sm:$0xc]
    %v532 = vor.u32 %v530, %v531
    %v533 = vld [vmem:[%s529] ss:$16 sm:$0x30]
    %v534 = vor.u32 %v532, %v533
    %v535 = vld [vmem:[%s529] ss:$16 sm:$0xc0]
    %v536 = vor.u32 %v534, %v535
    %s537 = scalar_lea.vmem [#allocation2], 389
    %v538 = vld [vmem:[%s537] ss:$16 sm:$0x3]
    %v539 = vld [vmem:[%s537] ss:$16 sm:$0xc]
    %v540 = vor.u32 %v538, %v539
    %v541 = vld [vmem:[%s537] ss:$16 sm:$0x30]
    %v542 = vor.u32 %v540, %v541
    %v543 = vld [vmem:[%s537] ss:$16 sm:$0xc0]
    %v544 = vor.u32 %v542, %v543
    %v545 = vmul.f32 %v520, 0.4723665
    %v546 = vmul.f32 %v528, 0.4723665
    %v547 = vmul.f32 %v536, 0.4723665
    %v548 = vmul.f32 %v544, 0.4723665
    %v549 = vmax.f32 %v509, %v545
    %v550 = vmax.f32 %v510, %v546
    %v551 = vmax.f32 %v511, %v547
    %v552 = vmax.f32 %v512, %v548
    %s553 = scalar_lea.vmem [#allocation2], 6
    %v554 = vld [vmem:[%s553] ss:$16 sm:$0x3]
    %v555 = vld [vmem:[%s553] ss:$16 sm:$0xc]
    %v556 = vor.u32 %v554, %v555
    %v557 = vld [vmem:[%s553] ss:$16 sm:$0x30]
    %v558 = vor.u32 %v556, %v557
    %v559 = vld [vmem:[%s553] ss:$16 sm:$0xc0]
    %v560 = vor.u32 %v558, %v559
    %s561 = scalar_lea.vmem [#allocation2], 134
    %v562 = vld [vmem:[%s561] ss:$16 sm:$0x3]
    %v563 = vld [vmem:[%s561] ss:$16 sm:$0xc]
    %v564 = vor.u32 %v562, %v563
    %v565 = vld [vmem:[%s561] ss:$16 sm:$0x30]
    %v566 = vor.u32 %v564, %v565
    %v567 = vld [vmem:[%s561] ss:$16 sm:$0xc0]
    %v568 = vor.u32 %v566, %v567
    %s569 = scalar_lea.vmem [#allocation2], 262
    %v570 = vld [vmem:[%s569] ss:$16 sm:$0x3]
    %v571 = vld [vmem:[%s569] ss:$16 sm:$0xc]
    %v572 = vor.u32 %v570, %v571
    %v573 = vld [vmem:[%s569] ss:$16 sm:$0x30]
    %v574 = vor.u32 %v572, %v573
    %v575 = vld [vmem:[%s569] ss:$16 sm:$0xc0]
    %v576 = vor.u32 %v574, %v575
    %s577 = scalar_lea.vmem [#allocation2], 390
    %v578 = vld [vmem:[%s577] ss:$16 sm:$0x3]
    %v579 = vld [vmem:[%s577] ss:$16 sm:$0xc]
    %v580 = vor.u32 %v578, %v579
    %v581 = vld [vmem:[%s577] ss:$16 sm:$0x30]
    %v582 = vor.u32 %v580, %v581
    %v583 = vld [vmem:[%s577] ss:$16 sm:$0xc0]
    %v584 = vor.u32 %v582, %v583
    %v585 = vmul.f32 %v560, 0.7788007
    %v586 = vmul.f32 %v568, 0.7788007
    %v587 = vmul.f32 %v576, 0.7788007
    %v588 = vmul.f32 %v584, 0.7788007
    %v589 = vmax.f32 %v549, %v585
    %v590 = vmax.f32 %v550, %v586
    %v591 = vmax.f32 %v551, %v587
    %v592 = vmax.f32 %v552, %v588
    %s593 = scalar_lea.vmem [#allocation2], 7
    %v594 = vld [vmem:[%s593] ss:$16 sm:$0x3]
    %v595 = vld [vmem:[%s593] ss:$16 sm:$0xc]
    %v596 = vor.u32 %v594, %v595
    %v597 = vld [vmem:[%s593] ss:$16 sm:$0x30]
    %v598 = vor.u32 %v596, %v597
    %v599 = vld [vmem:[%s593] ss:$16 sm:$0xc0]
    %v600 = vor.u32 %v598, %v599
    %s601 = scalar_lea.vmem [#allocation2], 135
    %v602 = vld [vmem:[%s601] ss:$16 sm:$0x3]
    %v603 = vld [vmem:[%s601] ss:$16 sm:$0xc]
    %v604 = vor.u32 %v602, %v603
    %v605 = vld [vmem:[%s601] ss:$16 sm:$0x30]
    %v606 = vor.u32 %v604, %v605
    %v607 = vld [vmem:[%s601] ss:$16 sm:$0xc0]
    %v608 = vor.u32 %v606, %v607
    %s609 = scalar_lea.vmem [#allocation2], 263
    %v610 = vld [vmem:[%s609] ss:$16 sm:$0x3]
    %v611 = vld [vmem:[%s609] ss:$16 sm:$0xc]
    %v612 = vor.u32 %v610, %v611
    %v613 = vld [vmem:[%s609] ss:$16 sm:$0x30]
    %v614 = vor.u32 %v612, %v613
    %v615 = vld [vmem:[%s609] ss:$16 sm:$0xc0]
    %v616 = vor.u32 %v614, %v615
    %s617 = scalar_lea.vmem [#allocation2], 391
    %v618 = vld [vmem:[%s617] ss:$16 sm:$0x3]
    %v619 = vld [vmem:[%s617] ss:$16 sm:$0xc]
    %v620 = vor.u32 %v618, %v619
    %v621 = vld [vmem:[%s617] ss:$16 sm:$0x30]
    %v622 = vor.u32 %v620, %v621
    %v623 = vld [vmem:[%s617] ss:$16 sm:$0xc0]
    %v624 = vor.u32 %v622, %v623
    %v625 = vmul.f32 %v600, 0.4723665
    %v626 = vmul.f32 %v608, 0.4723665
    %v627 = vmul.f32 %v616, 0.4723665
    %v628 = vmul.f32 %v624, 0.4723665
    %v629 = vmax.f32 %v589, %v625
    %v630 = vmax.f32 %v590, %v626
    %v631 = vmax.f32 %v591, %v627
    %v632 = vmax.f32 %v592, %v628
    %s633 = scalar_lea.vmem [#allocation2], 8
    %v634 = vld [vmem:[%s633] ss:$16 sm:$0x3]
    %v635 = vld [vmem:[%s633] ss:$16 sm:$0xc]
    %v636 = vor.u32 %v634, %v635
    %v637 = vld [vmem:[%s633] ss:$16 sm:$0x30]
    %v638 = vor.u32 %v636, %v637
    %v639 = vld [vmem:[%s633] ss:$16 sm:$0xc0]
    %v640 = vor.u32 %v638, %v639
    %s641 = scalar_lea.vmem [#allocation2], 136
    %v642 = vld [vmem:[%s641] ss:$16 sm:$0x3]
    %v643 = vld [vmem:[%s641] ss:$16 sm:$0xc]
    %v644 = vor.u32 %v642, %v643
    %v645 = vld [vmem:[%s641] ss:$16 sm:$0x30]
    %v646 = vor.u32 %v644, %v645
    %v647 = vld [vmem:[%s641] ss:$16 sm:$0xc0]
    %v648 = vor.u32 %v646, %v647
    %s649 = scalar_lea.vmem [#allocation2], 264
    %v650 = vld [vmem:[%s649] ss:$16 sm:$0x3]
    %v651 = vld [vmem:[%s649] ss:$16 sm:$0xc]
    %v652 = vor.u32 %v650, %v651
    %v653 = vld [vmem:[%s649] ss:$16 sm:$0x30]
    %v654 = vor.u32 %v652, %v653
    %v655 = vld [vmem:[%s649] ss:$16 sm:$0xc0]
    %v656 = vor.u32 %v654, %v655
    %s657 = scalar_lea.vmem [#allocation2], 392
    %v658 = vld [vmem:[%s657] ss:$16 sm:$0x3]
    %v659 = vld [vmem:[%s657] ss:$16 sm:$0xc]
    %v660 = vor.u32 %v658, %v659
    %v661 = vld [vmem:[%s657] ss:$16 sm:$0x30]
    %v662 = vor.u32 %v660, %v661
    %v663 = vld [vmem:[%s657] ss:$16 sm:$0xc0]
    %v664 = vor.u32 %v662, %v663
    %v665 = vmul.f32 %v640, 0.13533528
    %v666 = vmul.f32 %v648, 0.13533528
    %v667 = vmul.f32 %v656, 0.13533528
    %v668 = vmul.f32 %v664, 0.13533528
    %v669 = vmax.f32 %v629, %v665
    %v670 = vmax.f32 %v630, %v666
    %v671 = vmax.f32 %v631, %v667
    %v672 = vmax.f32 %v632, %v668
    %s673 = scalar_lea.vmem [#allocation2], 9
    %v674 = vld [vmem:[%s673] ss:$16 sm:$0x3]
    %v675 = vld [vmem:[%s673] ss:$16 sm:$0xc]
    %v676 = vor.u32 %v674, %v675
    %v677 = vld [vmem:[%s673] ss:$16 sm:$0x30]
    %v678 = vor.u32 %v676, %v677
    %v679 = vld [vmem:[%s673] ss:$16 sm:$0xc0]
    %v680 = vor.u32 %v678, %v679
    %s681 = scalar_lea.vmem [#allocation2], 137
    %v682 = vld [vmem:[%s681] ss:$16 sm:$0x3]
    %v683 = vld [vmem:[%s681] ss:$16 sm:$0xc]
    %v684 = vor.u32 %v682, %v683
    %v685 = vld [vmem:[%s681] ss:$16 sm:$0x30]
    %v686 = vor.u32 %v684, %v685
    %v687 = vld [vmem:[%s681] ss:$16 sm:$0xc0]
    %v688 = vor.u32 %v686, %v687
    %s689 = scalar_lea.vmem [#allocation2], 265
    %v690 = vld [vmem:[%s689] ss:$16 sm:$0x3]
    %v691 = vld [vmem:[%s689] ss:$16 sm:$0xc]
    %v692 = vor.u32 %v690, %v691
    %v693 = vld [vmem:[%s689] ss:$16 sm:$0x30]
    %v694 = vor.u32 %v692, %v693
    %v695 = vld [vmem:[%s689] ss:$16 sm:$0xc0]
    %v696 = vor.u32 %v694, %v695
    %s697 = scalar_lea.vmem [#allocation2], 393
    %v698 = vld [vmem:[%s697] ss:$16 sm:$0x3]
    %v699 = vld [vmem:[%s697] ss:$16 sm:$0xc]
    %v700 = vor.u32 %v698, %v699
    %v701 = vld [vmem:[%s697] ss:$16 sm:$0x30]
    %v702 = vor.u32 %v700, %v701
    %v703 = vld [vmem:[%s697] ss:$16 sm:$0xc0]
    %v704 = vor.u32 %v702, %v703
    %v705 = vmul.f32 %v680, 0.60653067
    %v706 = vmul.f32 %v688, 0.60653067
    %v707 = vmul.f32 %v696, 0.60653067
    %v708 = vmul.f32 %v704, 0.60653067
    %v709 = vmax.f32 %v669, %v705
    %v710 = vmax.f32 %v670, %v706
    %v711 = vmax.f32 %v671, %v707
    %v712 = vmax.f32 %v672, %v708
    %s713 = scalar_lea.vmem [#allocation2], 10
    %v714 = vld [vmem:[%s713] ss:$16 sm:$0x3]
    %v715 = vld [vmem:[%s713] ss:$16 sm:$0xc]
    %v716 = vor.u32 %v714, %v715
    %v717 = vld [vmem:[%s713] ss:$16 sm:$0x30]
    %v718 = vor.u32 %v716, %v717
    %v719 = vld [vmem:[%s713] ss:$16 sm:$0xc0]
    %v720 = vor.u32 %v718, %v719
    %s721 = scalar_lea.vmem [#allocation2], 138
    %v722 = vld [vmem:[%s721] ss:$16 sm:$0x3]
    %v723 = vld [vmem:[%s721] ss:$16 sm:$0xc]
    %v724 = vor.u32 %v722, %v723
    %v725 = vld [vmem:[%s721] ss:$16 sm:$0x30]
    %v726 = vor.u32 %v724, %v725
    %v727 = vld [vmem:[%s721] ss:$16 sm:$0xc0]
    %v728 = vor.u32 %v726, %v727
    %s729 = scalar_lea.vmem [#allocation2], 266
    %v730 = vld [vmem:[%s729] ss:$16 sm:$0x3]
    %v731 = vld [vmem:[%s729] ss:$16 sm:$0xc]
    %v732 = vor.u32 %v730, %v731
    %v733 = vld [vmem:[%s729] ss:$16 sm:$0x30]
    %v734 = vor.u32 %v732, %v733
    %v735 = vld [vmem:[%s729] ss:$16 sm:$0xc0]
    %v736 = vor.u32 %v734, %v735
    %s737 = scalar_lea.vmem [#allocation2], 394
    %v738 = vld [vmem:[%s737] ss:$16 sm:$0x3]
    %v739 = vld [vmem:[%s737] ss:$16 sm:$0xc]
    %v740 = vor.u32 %v738, %v739
    %v741 = vld [vmem:[%s737] ss:$16 sm:$0x30]
    %v742 = vor.u32 %v740, %v741
    %v743 = vld [vmem:[%s737] ss:$16 sm:$0xc0]
    %v744 = vor.u32 %v742, %v743
    %v745 = vmax.f32 %v709, %v720
    %v746 = vmax.f32 %v710, %v728
    %v747 = vmax.f32 %v711, %v736
    %v748 = vmax.f32 %v712, %v744
    %s749 = scalar_lea.vmem [#allocation2], 11
    %v750 = vld [vmem:[%s749] ss:$16 sm:$0x3]
    %v751 = vld [vmem:[%s749] ss:$16 sm:$0xc]
    %v752 = vor.u32 %v750, %v751
    %v753 = vld [vmem:[%s749] ss:$16 sm:$0x30]
    %v754 = vor.u32 %v752, %v753
    %v755 = vld [vmem:[%s749] ss:$16 sm:$0xc0]
    %v756 = vor.u32 %v754, %v755
    %s757 = scalar_lea.vmem [#allocation2], 139
    %v758 = vld [vmem:[%s757] ss:$16 sm:$0x3]
    %v759 = vld [vmem:[%s757] ss:$16 sm:$0xc]
    %v760 = vor.u32 %v758, %v759
    %v761 = vld [vmem:[%s757] ss:$16 sm:$0x30]
    %v762 = vor.u32 %v760, %v761
    %v763 = vld [vmem:[%s757] ss:$16 sm:$0xc0]
    %v764 = vor.u32 %v762, %v763
    %s765 = scalar_lea.vmem [#allocation2], 267
    %v766 = vld [vmem:[%s765] ss:$16 sm:$0x3]
    %v767 = vld [vmem:[%s765] ss:$16 sm:$0xc]
    %v768 = vor.u32 %v766, %v767
    %v769 = vld [vmem:[%s765] ss:$16 sm:$0x30]
    %v770 = vor.u32 %v768, %v769
    %v771 = vld [vmem:[%s765] ss:$16 sm:$0xc0]
    %v772 = vor.u32 %v770, %v771
    %s773 = scalar_lea.vmem [#allocation2], 395
    %v774 = vld [vmem:[%s773] ss:$16 sm:$0x3]
    %v775 = vld [vmem:[%s773] ss:$16 sm:$0xc]
    %v776 = vor.u32 %v774, %v775
    %v777 = vld [vmem:[%s773] ss:$16 sm:$0x30]
    %v778 = vor.u32 %v776, %v777
    %v779 = vld [vmem:[%s773] ss:$16 sm:$0xc0]
    %v780 = vor.u32 %v778, %v779
    %v781 = vmul.f32 %v756, 0.60653067
    %v782 = vmul.f32 %v764, 0.60653067
    %v783 = vmul.f32 %v772, 0.60653067
    %v784 = vmul.f32 %v780, 0.60653067
    %v785 = vmax.f32 %v745, %v781
    %v786 = vmax.f32 %v746, %v782
    %v787 = vmax.f32 %v747, %v783
    %v788 = vmax.f32 %v748, %v784
    %s789 = scalar_lea.vmem [#allocation2], 12
    %v790 = vld [vmem:[%s789] ss:$16 sm:$0x3]
    %v791 = vld [vmem:[%s789] ss:$16 sm:$0xc]
    %v792 = vor.u32 %v790, %v791
    %v793 = vld [vmem:[%s789] ss:$16 sm:$0x30]
    %v794 = vor.u32 %v792, %v793
    %v795 = vld [vmem:[%s789] ss:$16 sm:$0xc0]
    %v796 = vor.u32 %v794, %v795
    %s797 = scalar_lea.vmem [#allocation2], 140
    %v798 = vld [vmem:[%s797] ss:$16 sm:$0x3]
    %v799 = vld [vmem:[%s797] ss:$16 sm:$0xc]
    %v800 = vor.u32 %v798, %v799
    %v801 = vld [vmem:[%s797] ss:$16 sm:$0x30]
    %v802 = vor.u32 %v800, %v801
    %v803 = vld [vmem:[%s797] ss:$16 sm:$0xc0]
    %v804 = vor.u32 %v802, %v803
    %s805 = scalar_lea.vmem [#allocation2], 268
    %v806 = vld [vmem:[%s805] ss:$16 sm:$0x3]
    %v807 = vld [vmem:[%s805] ss:$16 sm:$0xc]
    %v808 = vor.u32 %v806, %v807
    %v809 = vld [vmem:[%s805] ss:$16 sm:$0x30]
    %v810 = vor.u32 %v808, %v809
    %v811 = vld [vmem:[%s805] ss:$16 sm:$0xc0]
    %v812 = vor.u32 %v810, %v811
    %s813 = scalar_lea.vmem [#allocation2], 396
    %v814 = vld [vmem:[%s813] ss:$16 sm:$0x3]
    %v815 = vld [vmem:[%s813] ss:$16 sm:$0xc]
    %v816 = vor.u32 %v814, %v815
    %v817 = vld [vmem:[%s813] ss:$16 sm:$0x30]
    %v818 = vor.u32 %v816, %v817
    %v819 = vld [vmem:[%s813] ss:$16 sm:$0xc0]
    %v820 = vor.u32 %v818, %v819
    %v821 = vmul.f32 %v796, 0.105399214
    %v822 = vmul.f32 %v804, 0.105399214
    %v823 = vmul.f32 %v812, 0.105399214
    %v824 = vmul.f32 %v820, 0.105399214
    %v825 = vmax.f32 %v785, %v821
    %v826 = vmax.f32 %v786, %v822
    %v827 = vmax.f32 %v787, %v823
    %v828 = vmax.f32 %v788, %v824
    %s829 = scalar_lea.vmem [#allocation2], 13
    %v830 = vld [vmem:[%s829] ss:$16 sm:$0x3]
    %v831 = vld [vmem:[%s829] ss:$16 sm:$0xc]
    %v832 = vor.u32 %v830, %v831
    %v833 = vld [vmem:[%s829] ss:$16 sm:$0x30]
    %v834 = vor.u32 %v832, %v833
    %v835 = vld [vmem:[%s829] ss:$16 sm:$0xc0]
    %v836 = vor.u32 %v834, %v835
    %s837 = scalar_lea.vmem [#allocation2], 141
    %v838 = vld [vmem:[%s837] ss:$16 sm:$0x3]
    %v839 = vld [vmem:[%s837] ss:$16 sm:$0xc]
    %v840 = vor.u32 %v838, %v839
    %v841 = vld [vmem:[%s837] ss:$16 sm:$0x30]
    %v842 = vor.u32 %v840, %v841
    %v843 = vld [vmem:[%s837] ss:$16 sm:$0xc0]
    %v844 = vor.u32 %v842, %v843
    %s845 = scalar_lea.vmem [#allocation2], 269
    %v846 = vld [vmem:[%s845] ss:$16 sm:$0x3]
    %v847 = vld [vmem:[%s845] ss:$16 sm:$0xc]
    %v848 = vor.u32 %v846, %v847
    %v849 = vld [vmem:[%s845] ss:$16 sm:$0x30]
    %v850 = vor.u32 %v848, %v849
    %v851 = vld [vmem:[%s845] ss:$16 sm:$0xc0]
    %v852 = vor.u32 %v850, %v851
    %s853 = scalar_lea.vmem [#allocation2], 397
    %v854 = vld [vmem:[%s853] ss:$16 sm:$0x3]
    %v855 = vld [vmem:[%s853] ss:$16 sm:$0xc]
    %v856 = vor.u32 %v854, %v855
    %v857 = vld [vmem:[%s853] ss:$16 sm:$0x30]
    %v858 = vor.u32 %v856, %v857
    %v859 = vld [vmem:[%s853] ss:$16 sm:$0xc0]
    %v860 = vor.u32 %v858, %v859
    %v861 = vmul.f32 %v836, 0.4723665
    %v862 = vmul.f32 %v844, 0.4723665
    %v863 = vmul.f32 %v852, 0.4723665
    %v864 = vmul.f32 %v860, 0.4723665
    %v865 = vmax.f32 %v825, %v861
    %v866 = vmax.f32 %v826, %v862
    %v867 = vmax.f32 %v827, %v863
    %v868 = vmax.f32 %v828, %v864
    %s869 = scalar_lea.vmem [#allocation2], 14
    %v870 = vld [vmem:[%s869] ss:$16 sm:$0x3]
    %v871 = vld [vmem:[%s869] ss:$16 sm:$0xc]
    %v872 = vor.u32 %v870, %v871
    %v873 = vld [vmem:[%s869] ss:$16 sm:$0x30]
    %v874 = vor.u32 %v872, %v873
    %v875 = vld [vmem:[%s869] ss:$16 sm:$0xc0]
    %v876 = vor.u32 %v874, %v875
    %s877 = scalar_lea.vmem [#allocation2], 142
    %v878 = vld [vmem:[%s877] ss:$16 sm:$0x3]
    %v879 = vld [vmem:[%s877] ss:$16 sm:$0xc]
    %v880 = vor.u32 %v878, %v879
    %v881 = vld [vmem:[%s877] ss:$16 sm:$0x30]
    %v882 = vor.u32 %v880, %v881
    %v883 = vld [vmem:[%s877] ss:$16 sm:$0xc0]
    %v884 = vor.u32 %v882, %v883
    %s885 = scalar_lea.vmem [#allocation2], 270
    %v886 = vld [vmem:[%s885] ss:$16 sm:$0x3]
    %v887 = vld [vmem:[%s885] ss:$16 sm:$0xc]
    %v888 = vor.u32 %v886, %v887
    %v889 = vld [vmem:[%s885] ss:$16 sm:$0x30]
    %v890 = vor.u32 %v888, %v889
    %v891 = vld [vmem:[%s885] ss:$16 sm:$0xc0]
    %v892 = vor.u32 %v890, %v891
    %s893 = scalar_lea.vmem [#allocation2], 398
    %v894 = vld [vmem:[%s893] ss:$16 sm:$0x3]
    %v895 = vld [vmem:[%s893] ss:$16 sm:$0xc]
    %v896 = vor.u32 %v894, %v895
    %v897 = vld [vmem:[%s893] ss:$16 sm:$0x30]
    %v898 = vor.u32 %v896, %v897
    %v899 = vld [vmem:[%s893] ss:$16 sm:$0xc0]
    %v900 = vor.u32 %v898, %v899
    %v901 = vmul.f32 %v876, 0.7788007
    %v902 = vmul.f32 %v884, 0.7788007
    %v903 = vmul.f32 %v892, 0.7788007
    %v904 = vmul.f32 %v900, 0.7788007
    %v905 = vmax.f32 %v865, %v901
    %v906 = vmax.f32 %v866, %v902
    %v907 = vmax.f32 %v867, %v903
    %v908 = vmax.f32 %v868, %v904
    %s909 = scalar_lea.vmem [#allocation2], 15
    %v910 = vld [vmem:[%s909] ss:$16 sm:$0x3]
    %v911 = vld [vmem:[%s909] ss:$16 sm:$0xc]
    %v912 = vor.u32 %v910, %v911
    %v913 = vld [vmem:[%s909] ss:$16 sm:$0x30]
    %v914 = vor.u32 %v912, %v913
    %v915 = vld [vmem:[%s909] ss:$16 sm:$0xc0]
    %v916 = vor.u32 %v914, %v915
    %s917 = scalar_lea.vmem [#allocation2], 143
    %v918 = vld [vmem:[%s917] ss:$16 sm:$0x3]
    %v919 = vld [vmem:[%s917] ss:$16 sm:$0xc]
    %v920 = vor.u32 %v918, %v919
    %v921 = vld [vmem:[%s917] ss:$16 sm:$0x30]
    %v922 = vor.u32 %v920, %v921
    %v923 = vld [vmem:[%s917] ss:$16 sm:$0xc0]
    %v924 = vor.u32 %v922, %v923
    %s925 = scalar_lea.vmem [#allocation2], 271
    %v926 = vld [vmem:[%s925] ss:$16 sm:$0x3]
    %v927 = vld [vmem:[%s925] ss:$16 sm:$0xc]
    %v928 = vor.u32 %v926, %v927
    %v929 = vld [vmem:[%s925] ss:$16 sm:$0x30]
    %v930 = vor.u32 %v928, %v929
    %v931 = vld [vmem:[%s925] ss:$16 sm:$0xc0]
    %v932 = vor.u32 %v930, %v931
    %s933 = scalar_lea.vmem [#allocation2], 399
    %v934 = vld [vmem:[%s933] ss:$16 sm:$0x3]
    %v935 = vld [vmem:[%s933] ss:$16 sm:$0xc]
    %v936 = vor.u32 %v934, %v935
    %v937 = vld [vmem:[%s933] ss:$16 sm:$0x30]
    %v938 = vor.u32 %v936, %v937
    %v939 = vld [vmem:[%s933] ss:$16 sm:$0xc0]
    %v940 = vor.u32 %v938, %v939
    %v941 = vmul.f32 %v916, 0.4723665
    %v942 = vmul.f32 %v924, 0.4723665
    %v943 = vmul.f32 %v932, 0.4723665
    %v944 = vmul.f32 %v940, 0.4723665
    %v945 = vmax.f32 %v905, %v941
    %v946 = vmax.f32 %v906, %v942
    %v947 = vmax.f32 %v907, %v943
    %v948 = vmax.f32 %v908, %v944
    %v949 = vld [vmem:[%s1] sm:$0xff]
    %v950 = vld [vmem:[%s1 + $0x8] sm:$0xff]
    %v951 = vld [vmem:[%s1 + $0x10] sm:$0xff]
    %v952 = vld [vmem:[%s1 + $0x18] sm:$0xff]
    %vm953 = vcmask 261120
    %v955 = vsel %vm953, %v949, 0
    %v958 = vsel %vm953, %v950, 0
    %v961 = vsel %vm953, %v951, 0
    %v964 = vsel %vm953, %v952, 0
    %966 = vmatpush.msra.mxu0 0.0
    %967 = vmatpush.msra.mxu0 0.0
    %968 = vmatpush.msra.mxu0 0.0
    %969 = vmatpush.msra.mxu0 0.0
    %970 = vmatpush.msra.mxu0 0.0
    %971 = vmatpush.msra.mxu0 0.0
    %972 = vmatpush.msra.mxu0 0.0
    %973 = vmatpush.msra.mxu0 0.0
    %974 = vmatpush.msra.mxu0 0.0
    %975 = vmatpush.msra.mxu0 0.0
    %976 = vmatpush.msra.mxu0 0.0
    %977 = vmatpush.msra.mxu0 0.0
    %978 = vmatpush.msra.mxu0 %v948
    %979 = vmatpush.msra.mxu0 %v947
    %980 = vmatpush.msra.mxu0 %v946
    %981 = vmatpush.msra.mxu0 %v945
    %982 = vmatmul.f32.gmra.mxu0 %v955
    %v983 = vpop.f32.mrf.mxu0
    %v984 = vadd.f32 0.0, %v983
    %985 = vmatmul.f32.gmra.mxu0 %v958
    %v986 = vpop.f32.mrf.mxu0
    %v987 = vadd.f32 0.0, %v986
    %988 = vmatmul.f32.gmra.mxu0 %v961
    %v989 = vpop.f32.mrf.mxu0
    %v990 = vadd.f32 0.0, %v989
    %991 = vmatmul.f32.gmra.mxu0 %v964
    %v992 = vpop.f32.mrf.mxu0
    %v993 = vadd.f32 0.0, %v992
    %994 = vdwg.mxu0
    %v995 = vmul.f32 %v984, %v984
    %v996 = vmul.f32 %v987, %v987
    %v997 = vmul.f32 %v990, %v990
    %v998 = vmul.f32 %v993, %v993
    %v999 = vadd.f32 %v995, %v996
    %v1000 = vadd.f32 %v999, %v997
    %v1001 = vadd.f32 %v1000, %v998
    %v1002 = vmax.f32 %v1001, 1e-24
    %v1003 = vrsqrt.pop %v1002
    %v1004 = vmul.f32 %v1003, %v1002
    %v1005 = vmul.f32 %v1004, %v1003
    %v1006 = vmul.f32 0.5, %v1005
    %v1007 = vsub.f32 1.5, %v1006
    %v1008 = vmul.f32 %v1003, %v1007
    %vm1009 = vweird.f32 %v1002
    %vm1010 = vweird.f32 %v1003
    %vm1011 = vmor %vm1009, %vm1010
    %v1012 = vsel %vm1011, %v1003, %v1008
    %v1013 = vmul.f32 %v984, %v1012
    %v1014 = vmul.f32 %v987, %v1012
    %v1015 = vmul.f32 %v990, %v1012
    %v1016 = vmul.f32 %v993, %v1012
    %v1018 = vrot.slane %v1013, 1
    %v1019 = vrot.slane %v1013, 2
    %v1020 = vrot.slane %v1013, 3
    %v1021 = vrot.slane %v1013, 4
    %v1022 = vrot.slane %v1013, 5
    %v1023 = vrot.slane %v1013, 6
    %v1024 = vrot.slane %v1013, 7
    %v1025 = vperm.slane %v1013, 0
    %v1026 = vperm.slane %v1018, 0
    %v1027 = vperm.slane %v1019, 0
    %v1028 = vperm.slane %v1020, 0
    %v1029 = vperm.slane %v1021, 0
    %v1030 = vperm.slane %v1022, 0
    %v1031 = vperm.slane %v1023, 0
    %v1032 = vperm.slane %v1024, 0
    %v1041 = vmul.f32 %v1025, %v1013
    %v1042 = vmul.f32 %v1026, %v1013
    %v1043 = vmul.f32 %v1027, %v1013
    %v1044 = vmul.f32 %v1028, %v1013
    %v1045 = vmul.f32 %v1029, %v1013
    %v1046 = vmul.f32 %v1030, %v1013
    %v1047 = vmul.f32 %v1031, %v1013
    %v1048 = vmul.f32 %v1032, %v1013
    %v1050 = vrot.slane %v1014, 1
    %v1051 = vrot.slane %v1014, 2
    %v1052 = vrot.slane %v1014, 3
    %v1053 = vrot.slane %v1014, 4
    %v1054 = vrot.slane %v1014, 5
    %v1055 = vrot.slane %v1014, 6
    %v1056 = vrot.slane %v1014, 7
    %v1057 = vperm.slane %v1014, 0
    %v1058 = vperm.slane %v1050, 0
    %v1059 = vperm.slane %v1051, 0
    %v1060 = vperm.slane %v1052, 0
    %v1061 = vperm.slane %v1053, 0
    %v1062 = vperm.slane %v1054, 0
    %v1063 = vperm.slane %v1055, 0
    %v1064 = vperm.slane %v1056, 0
    %v1073 = vmul.f32 %v1057, %v1014
    %v1074 = vmul.f32 %v1058, %v1014
    %v1075 = vmul.f32 %v1059, %v1014
    %v1076 = vmul.f32 %v1060, %v1014
    %v1077 = vmul.f32 %v1061, %v1014
    %v1078 = vmul.f32 %v1062, %v1014
    %v1079 = vmul.f32 %v1063, %v1014
    %v1080 = vmul.f32 %v1064, %v1014
    %v1081 = vadd.f32 %v1041, %v1073
    %v1082 = vadd.f32 %v1042, %v1074
    %v1083 = vadd.f32 %v1043, %v1075
    %v1084 = vadd.f32 %v1044, %v1076
    %v1085 = vadd.f32 %v1045, %v1077
    %v1086 = vadd.f32 %v1046, %v1078
    %v1087 = vadd.f32 %v1047, %v1079
    %v1088 = vadd.f32 %v1048, %v1080
    %v1090 = vrot.slane %v1015, 1
    %v1091 = vrot.slane %v1015, 2
    %v1092 = vrot.slane %v1015, 3
    %v1093 = vrot.slane %v1015, 4
    %v1094 = vrot.slane %v1015, 5
    %v1095 = vrot.slane %v1015, 6
    %v1096 = vrot.slane %v1015, 7
    %v1097 = vperm.slane %v1015, 0
    %v1098 = vperm.slane %v1090, 0
    %v1099 = vperm.slane %v1091, 0
    %v1100 = vperm.slane %v1092, 0
    %v1101 = vperm.slane %v1093, 0
    %v1102 = vperm.slane %v1094, 0
    %v1103 = vperm.slane %v1095, 0
    %v1104 = vperm.slane %v1096, 0
    %v1113 = vmul.f32 %v1097, %v1015
    %v1114 = vmul.f32 %v1098, %v1015
    %v1115 = vmul.f32 %v1099, %v1015
    %v1116 = vmul.f32 %v1100, %v1015
    %v1117 = vmul.f32 %v1101, %v1015
    %v1118 = vmul.f32 %v1102, %v1015
    %v1119 = vmul.f32 %v1103, %v1015
    %v1120 = vmul.f32 %v1104, %v1015
    %v1121 = vadd.f32 %v1081, %v1113
    %v1122 = vadd.f32 %v1082, %v1114
    %v1123 = vadd.f32 %v1083, %v1115
    %v1124 = vadd.f32 %v1084, %v1116
    %v1125 = vadd.f32 %v1085, %v1117
    %v1126 = vadd.f32 %v1086, %v1118
    %v1127 = vadd.f32 %v1087, %v1119
    %v1128 = vadd.f32 %v1088, %v1120
    %v1130 = vrot.slane %v1016, 1
    %v1131 = vrot.slane %v1016, 2
    %v1132 = vrot.slane %v1016, 3
    %v1133 = vrot.slane %v1016, 4
    %v1134 = vrot.slane %v1016, 5
    %v1135 = vrot.slane %v1016, 6
    %v1136 = vrot.slane %v1016, 7
    %v1137 = vperm.slane %v1016, 0
    %v1138 = vperm.slane %v1130, 0
    %v1139 = vperm.slane %v1131, 0
    %v1140 = vperm.slane %v1132, 0
    %v1141 = vperm.slane %v1133, 0
    %v1142 = vperm.slane %v1134, 0
    %v1143 = vperm.slane %v1135, 0
    %v1144 = vperm.slane %v1136, 0
    %v1153 = vmul.f32 %v1137, %v1016
    %v1154 = vmul.f32 %v1138, %v1016
    %v1155 = vmul.f32 %v1139, %v1016
    %v1156 = vmul.f32 %v1140, %v1016
    %v1157 = vmul.f32 %v1141, %v1016
    %v1158 = vmul.f32 %v1142, %v1016
    %v1159 = vmul.f32 %v1143, %v1016
    %v1160 = vmul.f32 %v1144, %v1016
    %v1161 = vadd.f32 %v1121, %v1153
    %v1162 = vadd.f32 %v1122, %v1154
    %v1163 = vadd.f32 %v1123, %v1155
    %v1164 = vadd.f32 %v1124, %v1156
    %v1165 = vadd.f32 %v1125, %v1157
    %v1166 = vadd.f32 %v1126, %v1158
    %v1167 = vadd.f32 %v1127, %v1159
    %v1168 = vadd.f32 %v1128, %v1160
    %v1169 = vld [vmem:[%s2] sm:$0xff]
    %v1170 = vld [vmem:[%s2 + $0x8] sm:$0xff]
    %v1171 = vld [vmem:[%s2 + $0x10] sm:$0xff]
    %v1172 = vld [vmem:[%s2 + $0x18] sm:$0xff]
    %v1173 = vld [vmem:[%s3] sm:$0xff]
    %v1174 = vld [vmem:[%s3 + $0x8] sm:$0xff]
    %v1175 = vld [vmem:[%s3 + $0x10] sm:$0xff]
    %v1176 = vld [vmem:[%s3 + $0x18] sm:$0xff]
    %1178 = vset.pattern.permute.xlu0 0
    %1179 = vperm.xlu0 %1178, %v1173
    %v1180 = vpop.permute.xlu0 %1179
    %1183 = vset.pattern.permute.xlu0 0
    %1184 = vperm.xlu0 %1183, %v1174
    %v1185 = vpop.permute.xlu0 %1184
    %1188 = vset.pattern.permute.xlu0 0
    %1189 = vperm.xlu0 %1188, %v1175
    %v1190 = vpop.permute.xlu0 %1189
    %1193 = vset.pattern.permute.xlu0 0
    %1194 = vperm.xlu0 %1193, %v1176
    %v1195 = vpop.permute.xlu0 %1194
    %vm1197 = vcmask 523264
    %v1199 = vsel %vm1197, %v1169, 0
    %v1202 = vsel %vm1197, %v1170, 0
    %v1205 = vsel %vm1197, %v1171, 0
    %v1208 = vsel %vm1197, %v1172, 0
    %1210 = vmatpush.msra.mxu0 0.0
    %1211 = vmatpush.msra.mxu0 0.0
    %1212 = vmatpush.msra.mxu0 0.0
    %1213 = vmatpush.msra.mxu0 0.0
    %1214 = vmatpush.msra.mxu0 0.0
    %1215 = vmatpush.msra.mxu0 0.0
    %1216 = vmatpush.msra.mxu0 0.0
    %1217 = vmatpush.msra.mxu0 0.0
    %1218 = vmatpush.msra.mxu0 %v1168
    %1219 = vmatpush.msra.mxu0 %v1167
    %1220 = vmatpush.msra.mxu0 %v1166
    %1221 = vmatpush.msra.mxu0 %v1165
    %1222 = vmatpush.msra.mxu0 %v1164
    %1223 = vmatpush.msra.mxu0 %v1163
    %1224 = vmatpush.msra.mxu0 %v1162
    %1225 = vmatpush.msra.mxu0 %v1161
    %1226 = vmatmul.f32.gmra.mxu0 %v1199
    %v1227 = vpop.f32.mrf.mxu0
    %v1228 = vadd.f32 %v1180, %v1227
    %1229 = vmatmul.f32.gmra.mxu0 %v1202
    %v1230 = vpop.f32.mrf.mxu0
    %v1231 = vadd.f32 %v1185, %v1230
    %1232 = vmatmul.f32.gmra.mxu0 %v1205
    %v1233 = vpop.f32.mrf.mxu0
    %v1234 = vadd.f32 %v1190, %v1233
    %1235 = vmatmul.f32.gmra.mxu0 %v1208
    %v1236 = vpop.f32.mrf.mxu0
    %v1237 = vadd.f32 %v1195, %v1236
    %1238 = vdwg.mxu0
    %v1239 = vmax.f32 %v1228, 0.0
    %v1240 = vmax.f32 %v1231, 0.0
    %v1241 = vmax.f32 %v1234, 0.0
    %v1242 = vmax.f32 %v1237, 0.0
    %v1243 = vld [vmem:[#allocation6] sm:$0xff]
    %v1244 = vld [vmem:[#allocation6 + $0x8] sm:$0xff]
    %v1245 = vld [vmem:[#allocation6 + $0x10] sm:$0xff]
    %v1246 = vld [vmem:[#allocation6 + $0x18] sm:$0xff]
    %v1247 = vld [vmem:[%s5] sm:$0xff]
    %v1248 = vld [vmem:[%s5 + $0x8] sm:$0xff]
    %v1249 = vld [vmem:[%s5 + $0x10] sm:$0xff]
    %v1250 = vld [vmem:[%s5 + $0x18] sm:$0xff]
    %1252 = vset.pattern.permute.xlu0 0
    %1253 = vperm.xlu0 %1252, %v1247
    %v1254 = vpop.permute.xlu0 %1253
    %1257 = vset.pattern.permute.xlu0 0
    %1258 = vperm.xlu0 %1257, %v1248
    %v1259 = vpop.permute.xlu0 %1258
    %1262 = vset.pattern.permute.xlu0 0
    %1263 = vperm.xlu0 %1262, %v1249
    %v1264 = vpop.permute.xlu0 %1263
    %1267 = vset.pattern.permute.xlu0 0
    %1268 = vperm.xlu0 %1267, %v1250
    %v1269 = vpop.permute.xlu0 %1268
    %v1272 = vsel %vm953, %v1243, 0
    %v1275 = vsel %vm953, %v1244, 0
    %v1278 = vsel %vm953, %v1245, 0
    %v1281 = vsel %vm953, %v1246, 0
    %1283 = vmatpush.msra.mxu0 0.0
    %1284 = vmatpush.msra.mxu0 0.0
    %1285 = vmatpush.msra.mxu0 0.0
    %1286 = vmatpush.msra.mxu0 0.0
    %1287 = vmatpush.msra.mxu0 0.0
    %1288 = vmatpush.msra.mxu0 0.0
    %1289 = vmatpush.msra.mxu0 0.0
    %1290 = vmatpush.msra.mxu0 0.0
    %1291 = vmatpush.msra.mxu0 0.0
    %1292 = vmatpush.msra.mxu0 0.0
    %1293 = vmatpush.msra.mxu0 0.0
    %1294 = vmatpush.msra.mxu0 0.0
    %1295 = vmatpush.msra.mxu0 %v1242
    %1296 = vmatpush.msra.mxu0 %v1241
    %1297 = vmatpush.msra.mxu0 %v1240
    %1298 = vmatpush.msra.mxu0 %v1239
    %1299 = vmatmul.f32.gmra.mxu0 %v1272
    %v1300 = vpop.f32.mrf.mxu0
    %v1301 = vadd.f32 %v1254, %v1300
    %1302 = vmatmul.f32.gmra.mxu0 %v1275
    %v1303 = vpop.f32.mrf.mxu0
    %v1304 = vadd.f32 %v1259, %v1303
    %1305 = vmatmul.f32.gmra.mxu0 %v1278
    %v1306 = vpop.f32.mrf.mxu0
    %v1307 = vadd.f32 %v1264, %v1306
    %1308 = vmatmul.f32.gmra.mxu0 %v1281
    %v1309 = vpop.f32.mrf.mxu0
    %v1310 = vadd.f32 %v1269, %v1309
    %1311 = vdwg.mxu0
    %v1312 = vmax.f32 %v1301, 0.0
    %v1313 = vmax.f32 %v1304, 0.0
    %v1314 = vmax.f32 %v1307, 0.0
    %v1315 = vmax.f32 %v1310, 0.0
    %v1316 = vld [vmem:[%s6] sm:$0xff]
    %v1317 = vld [vmem:[%s7] sm:$0xff]
    %1319 = vset.pattern.permute.xlu0 0
    %1320 = vperm.xlu0 %1319, %v1317
    %v1321 = vpop.permute.xlu0 %1320
    %v1324 = vsel %vm953, %v1316, 0
    %1326 = vmatpush.msra.mxu0 0.0
    %1327 = vmatpush.msra.mxu0 0.0
    %1328 = vmatpush.msra.mxu0 0.0
    %1329 = vmatpush.msra.mxu0 0.0
    %1330 = vmatpush.msra.mxu0 0.0
    %1331 = vmatpush.msra.mxu0 0.0
    %1332 = vmatpush.msra.mxu0 0.0
    %1333 = vmatpush.msra.mxu0 0.0
    %1334 = vmatpush.msra.mxu0 0.0
    %1335 = vmatpush.msra.mxu0 0.0
    %1336 = vmatpush.msra.mxu0 0.0
    %1337 = vmatpush.msra.mxu0 0.0
    %1338 = vmatpush.msra.mxu0 %v1315
    %1339 = vmatpush.msra.mxu0 %v1314
    %1340 = vmatpush.msra.mxu0 %v1313
    %1341 = vmatpush.msra.mxu0 %v1312
    %1342 = vmatmul.f32.gmra.mxu0 %v1324
    %v1343 = vpop.f32.mrf.mxu0
    %v1344 = vadd.f32 %v1321, %v1343
    %1345 = vdwg.mxu0
    %v1346 = vmul.f32 %v1344, %v1344
    %v1347 = vrot.slane %v1346, 4
    %v1348 = vadd.f32 %v1346, %v1347
    %v1349 = vrot.slane %v1348, 2
    %v1350 = vadd.f32 %v1348, %v1349
    %v1351 = vrot.slane %v1350, 1
    %v1352 = vadd.f32 %v1350, %v1351
    %v1353 = vmax.f32 %v1352, 1e-24
    %v1354 = vrsqrt.pop %v1353
    %v1355 = vmul.f32 %v1354, %v1353
    %v1356 = vmul.f32 %v1355, %v1354
    %v1357 = vmul.f32 0.5, %v1356
    %v1358 = vsub.f32 1.5, %v1357
    %v1359 = vmul.f32 %v1354, %v1358
    %vm1360 = vweird.f32 %v1353
    %vm1361 = vweird.f32 %v1354
    %vm1362 = vmor %vm1360, %vm1361
    %v1363 = vsel %vm1362, %v1354, %v1359
    %v1364 = vmul.f32 %v1344, %v1363
    %v1365 = vld [vmem:[#allocation2] sm:$0xff]
    %v1366 = vld [vmem:[#allocation2 + $0x8] sm:$0xff]
    %v1367 = vld [vmem:[#allocation2 + $0x10] sm:$0xff]
    %v1368 = vld [vmem:[#allocation2 + $0x18] sm:$0xff]
    %v1369 = vld [vmem:[#allocation2 + $0x20] sm:$0xff]
    %v1370 = vld [vmem:[#allocation2 + $0x28] sm:$0xff]
    %v1371 = vld [vmem:[#allocation2 + $0x30] sm:$0xff]
    %v1372 = vld [vmem:[#allocation2 + $0x38] sm:$0xff]
    %v1373 = vperm.slane %v1364, 0
    %v1374 = vmul.f32 %v1373, %v1365
    %v1375 = vmul.f32 %v1373, %v1366
    %v1376 = vmul.f32 %v1373, %v1367
    %v1377 = vmul.f32 %v1373, %v1368
    %v1378 = vmul.f32 %v1373, %v1369
    %v1379 = vmul.f32 %v1373, %v1370
    %v1380 = vmul.f32 %v1373, %v1371
    %v1381 = vmul.f32 %v1373, %v1372
    %v1382 = vld [vmem:[#allocation2 + $0x40] sm:$0xff]
    %v1383 = vld [vmem:[#allocation2 + $0x48] sm:$0xff]
    %v1384 = vld [vmem:[#allocation2 + $0x50] sm:$0xff]
    %v1385 = vld [vmem:[#allocation2 + $0x58] sm:$0xff]
    %v1386 = vld [vmem:[#allocation2 + $0x60] sm:$0xff]
    %v1387 = vld [vmem:[#allocation2 + $0x68] sm:$0xff]
    %v1388 = vld [vmem:[#allocation2 + $0x70] sm:$0xff]
    %v1389 = vld [vmem:[#allocation2 + $0x78] sm:$0xff]
    %v1390 = vperm.slane %v1364, 1
    %v1391 = vmul.f32 %v1390, %v1382
    %v1392 = vmul.f32 %v1390, %v1383
    %v1393 = vmul.f32 %v1390, %v1384
    %v1394 = vmul.f32 %v1390, %v1385
    %v1395 = vmul.f32 %v1390, %v1386
    %v1396 = vmul.f32 %v1390, %v1387
    %v1397 = vmul.f32 %v1390, %v1388
    %v1398 = vmul.f32 %v1390, %v1389
    %v1399 = vadd.f32 %v1374, %v1391
    %v1400 = vadd.f32 %v1375, %v1392
    %v1401 = vadd.f32 %v1376, %v1393
    %v1402 = vadd.f32 %v1377, %v1394
    %v1403 = vadd.f32 %v1378, %v1395
    %v1404 = vadd.f32 %v1379, %v1396
    %v1405 = vadd.f32 %v1380, %v1397
    %v1406 = vadd.f32 %v1381, %v1398
    %v1407 = vld [vmem:[#allocation2 + $0x80] sm:$0xff]
    %v1408 = vld [vmem:[#allocation2 + $0x88] sm:$0xff]
    %v1409 = vld [vmem:[#allocation2 + $0x90] sm:$0xff]
    %v1410 = vld [vmem:[#allocation2 + $0x98] sm:$0xff]
    %v1411 = vld [vmem:[#allocation2 + $0xa0] sm:$0xff]
    %v1412 = vld [vmem:[#allocation2 + $0xa8] sm:$0xff]
    %v1413 = vld [vmem:[#allocation2 + $0xb0] sm:$0xff]
    %v1414 = vld [vmem:[#allocation2 + $0xb8] sm:$0xff]
    %v1415 = vperm.slane %v1364, 2
    %v1416 = vmul.f32 %v1415, %v1407
    %v1417 = vmul.f32 %v1415, %v1408
    %v1418 = vmul.f32 %v1415, %v1409
    %v1419 = vmul.f32 %v1415, %v1410
    %v1420 = vmul.f32 %v1415, %v1411
    %v1421 = vmul.f32 %v1415, %v1412
    %v1422 = vmul.f32 %v1415, %v1413
    %v1423 = vmul.f32 %v1415, %v1414
    %v1424 = vadd.f32 %v1399, %v1416
    %v1425 = vadd.f32 %v1400, %v1417
    %v1426 = vadd.f32 %v1401, %v1418
    %v1427 = vadd.f32 %v1402, %v1419
    %v1428 = vadd.f32 %v1403, %v1420
    %v1429 = vadd.f32 %v1404, %v1421
    %v1430 = vadd.f32 %v1405, %v1422
    %v1431 = vadd.f32 %v1406, %v1423
    %v1432 = vld [vmem:[#allocation2 + $0xc0] sm:$0xff]
    %v1433 = vld [vmem:[#allocation2 + $0xc8] sm:$0xff]
    %v1434 = vld [vmem:[#allocation2 + $0xd0] sm:$0xff]
    %v1435 = vld [vmem:[#allocation2 + $0xd8] sm:$0xff]
    %v1436 = vld [vmem:[#allocation2 + $0xe0] sm:$0xff]
    %v1437 = vld [vmem:[#allocation2 + $0xe8] sm:$0xff]
    %v1438 = vld [vmem:[#allocation2 + $0xf0] sm:$0xff]
    %v1439 = vld [vmem:[#allocation2 + $0xf8] sm:$0xff]
    %v1440 = vperm.slane %v1364, 3
    %v1441 = vmul.f32 %v1440, %v1432
    %v1442 = vmul.f32 %v1440, %v1433
    %v1443 = vmul.f32 %v1440, %v1434
    %v1444 = vmul.f32 %v1440, %v1435
    %v1445 = vmul.f32 %v1440, %v1436
    %v1446 = vmul.f32 %v1440, %v1437
    %v1447 = vmul.f32 %v1440, %v1438
    %v1448 = vmul.f32 %v1440, %v1439
    %v1449 = vadd.f32 %v1424, %v1441
    %v1450 = vadd.f32 %v1425, %v1442
    %v1451 = vadd.f32 %v1426, %v1443
    %v1452 = vadd.f32 %v1427, %v1444
    %v1453 = vadd.f32 %v1428, %v1445
    %v1454 = vadd.f32 %v1429, %v1446
    %v1455 = vadd.f32 %v1430, %v1447
    %v1456 = vadd.f32 %v1431, %v1448
    %v1457 = vld [vmem:[#allocation2 + $0x100] sm:$0xff]
    %v1458 = vld [vmem:[#allocation2 + $0x108] sm:$0xff]
    %v1459 = vld [vmem:[#allocation2 + $0x110] sm:$0xff]
    %v1460 = vld [vmem:[#allocation2 + $0x118] sm:$0xff]
    %v1461 = vld [vmem:[#allocation2 + $0x120] sm:$0xff]
    %v1462 = vld [vmem:[#allocation2 + $0x128] sm:$0xff]
    %v1463 = vld [vmem:[#allocation2 + $0x130] sm:$0xff]
    %v1464 = vld [vmem:[#allocation2 + $0x138] sm:$0xff]
    %v1465 = vperm.slane %v1364, 4
    %v1466 = vmul.f32 %v1465, %v1457
    %v1467 = vmul.f32 %v1465, %v1458
    %v1468 = vmul.f32 %v1465, %v1459
    %v1469 = vmul.f32 %v1465, %v1460
    %v1470 = vmul.f32 %v1465, %v1461
    %v1471 = vmul.f32 %v1465, %v1462
    %v1472 = vmul.f32 %v1465, %v1463
    %v1473 = vmul.f32 %v1465, %v1464
    %v1474 = vadd.f32 %v1449, %v1466
    %v1475 = vadd.f32 %v1450, %v1467
    %v1476 = vadd.f32 %v1451, %v1468
    %v1477 = vadd.f32 %v1452, %v1469
    %v1478 = vadd.f32 %v1453, %v1470
    %v1479 = vadd.f32 %v1454, %v1471
    %v1480 = vadd.f32 %v1455, %v1472
    %v1481 = vadd.f32 %v1456, %v1473
    %v1482 = vld [vmem:[#allocation2 + $0x140] sm:$0xff]
    %v1483 = vld [vmem:[#allocation2 + $0x148] sm:$0xff]
    %v1484 = vld [vmem:[#allocation2 + $0x150] sm:$0xff]
    %v1485 = vld [vmem:[#allocation2 + $0x158] sm:$0xff]
    %v1486 = vld [vmem:[#allocation2 + $0x160] sm:$0xff]
    %v1487 = vld [vmem:[#allocation2 + $0x168] sm:$0xff]
    %v1488 = vld [vmem:[#allocation2 + $0x170] sm:$0xff]
    %v1489 = vld [vmem:[#allocation2 + $0x178] sm:$0xff]
    %v1490 = vperm.slane %v1364, 5
    %v1491 = vmul.f32 %v1490, %v1482
    %v1492 = vmul.f32 %v1490, %v1483
    %v1493 = vmul.f32 %v1490, %v1484
    %v1494 = vmul.f32 %v1490, %v1485
    %v1495 = vmul.f32 %v1490, %v1486
    %v1496 = vmul.f32 %v1490, %v1487
    %v1497 = vmul.f32 %v1490, %v1488
    %v1498 = vmul.f32 %v1490, %v1489
    %v1499 = vadd.f32 %v1474, %v1491
    %v1500 = vadd.f32 %v1475, %v1492
    %v1501 = vadd.f32 %v1476, %v1493
    %v1502 = vadd.f32 %v1477, %v1494
    %v1503 = vadd.f32 %v1478, %v1495
    %v1504 = vadd.f32 %v1479, %v1496
    %v1505 = vadd.f32 %v1480, %v1497
    %v1506 = vadd.f32 %v1481, %v1498
    %v1507 = vld [vmem:[#allocation2 + $0x180] sm:$0xff]
    %v1508 = vld [vmem:[#allocation2 + $0x188] sm:$0xff]
    %v1509 = vld [vmem:[#allocation2 + $0x190] sm:$0xff]
    %v1510 = vld [vmem:[#allocation2 + $0x198] sm:$0xff]
    %v1511 = vld [vmem:[#allocation2 + $0x1a0] sm:$0xff]
    %v1512 = vld [vmem:[#allocation2 + $0x1a8] sm:$0xff]
    %v1513 = vld [vmem:[#allocation2 + $0x1b0] sm:$0xff]
    %v1514 = vld [vmem:[#allocation2 + $0x1b8] sm:$0xff]
    %v1515 = vperm.slane %v1364, 6
    %v1516 = vmul.f32 %v1515, %v1507
    %v1517 = vmul.f32 %v1515, %v1508
    %v1518 = vmul.f32 %v1515, %v1509
    %v1519 = vmul.f32 %v1515, %v1510
    %v1520 = vmul.f32 %v1515, %v1511
    %v1521 = vmul.f32 %v1515, %v1512
    %v1522 = vmul.f32 %v1515, %v1513
    %v1523 = vmul.f32 %v1515, %v1514
    %v1524 = vadd.f32 %v1499, %v1516
    %v1525 = vadd.f32 %v1500, %v1517
    %v1526 = vadd.f32 %v1501, %v1518
    %v1527 = vadd.f32 %v1502, %v1519
    %v1528 = vadd.f32 %v1503, %v1520
    %v1529 = vadd.f32 %v1504, %v1521
    %v1530 = vadd.f32 %v1505, %v1522
    %v1531 = vadd.f32 %v1506, %v1523
    %v1532 = vld [vmem:[#allocation2 + $0x1c0] sm:$0xff]
    %v1533 = vld [vmem:[#allocation2 + $0x1c8] sm:$0xff]
    %v1534 = vld [vmem:[#allocation2 + $0x1d0] sm:$0xff]
    %v1535 = vld [vmem:[#allocation2 + $0x1d8] sm:$0xff]
    %v1536 = vld [vmem:[#allocation2 + $0x1e0] sm:$0xff]
    %v1537 = vld [vmem:[#allocation2 + $0x1e8] sm:$0xff]
    %v1538 = vld [vmem:[#allocation2 + $0x1f0] sm:$0xff]
    %v1539 = vld [vmem:[#allocation2 + $0x1f8] sm:$0xff]
    %v1540 = vperm.slane %v1364, 7
    %v1541 = vmul.f32 %v1540, %v1532
    %v1542 = vmul.f32 %v1540, %v1533
    %v1543 = vmul.f32 %v1540, %v1534
    %v1544 = vmul.f32 %v1540, %v1535
    %v1545 = vmul.f32 %v1540, %v1536
    %v1546 = vmul.f32 %v1540, %v1537
    %v1547 = vmul.f32 %v1540, %v1538
    %v1548 = vmul.f32 %v1540, %v1539
    %v1549 = vadd.f32 %v1524, %v1541
    %v1550 = vadd.f32 %v1525, %v1542
    %v1551 = vadd.f32 %v1526, %v1543
    %v1552 = vadd.f32 %v1527, %v1544
    %v1553 = vadd.f32 %v1528, %v1545
    %v1554 = vadd.f32 %v1529, %v1546
    %v1555 = vadd.f32 %v1530, %v1547
    %v1556 = vadd.f32 %v1531, %v1548
    %1557 = vst [vmem:[#allocation8] sm:$0xff] %v1549
    %1558 = vst [vmem:[#allocation8 + $0x8] sm:$0xff] %v1550
    %1559 = vst [vmem:[#allocation8 + $0x10] sm:$0xff] %v1551
    %1560 = vst [vmem:[#allocation8 + $0x18] sm:$0xff] %v1552
    %1561 = vst [vmem:[#allocation8 + $0x20] sm:$0xff] %v1553
    %1562 = vst [vmem:[#allocation8 + $0x28] sm:$0xff] %v1554
    %1563 = vst [vmem:[#allocation8 + $0x30] sm:$0xff] %v1555
    %1564 = vst [vmem:[#allocation8 + $0x38] sm:$0xff] %v1556
    // Predicated region
    $region42: #{tpu_custom_call.1} parent=1 // pred_check
      _
    $region43: #{tpu_custom_call.1} parent=1 // pred_check_branch
      %1566 = sbr.rel (0) target = $region45
    $region44: #{tpu_custom_call.1} parent=1 // pred_region
      %1568 = vsyncadd [#allocation5], 0
      %s1569 = sshll.u32 [#allocation8], 4
      %s1570 = int_to_ptr.vmem [resolvable:$true] %s1569
      %s1571 = sshll.u32 %s8, 4
      %s1572 = int_to_ptr.hbm [resolvable:$true] %s1571
      %1577 = dma.vmem_to_hbm [thread:$0]  %s1570, 1024, %s1572, [#allocation5], 128, 128, 8
    $region45: #{tpu_custom_call.1} parent=1 // pred_fallthru
      _
    // Predicated region
    $region46: #{tpu_custom_call.1} parent=1 // pred_check
      _
    $region47: #{tpu_custom_call.1} parent=1 // pred_check_branch
      %1579 = sbr.rel (0) target = $region49
    $region48: #{tpu_custom_call.1} parent=1 // pred_region
      %1581 = dma.done [#allocation5], 1024
    $region49: #{tpu_custom_call.1} parent=1 // pred_fallthru
      _
    %1582 = vsyncpa [#allocation4], 1
    %1583 = vsyncpa [#allocation7], 1
    %1584 = vsyncpa [#allocation5], 1

</llo_original>
